<compile_context>
chip_gen: v6e
topology: v6e:2x2x1
jax: 0.10.0
libtpu: 0.0.40
codegen_flags: <defaults>
</compile_context>

<pallas_src>
import math
import functools

import jax
import jax.numpy as jnp
from jax import lax
from jax.experimental import pallas as pl
from jax.experimental.pallas import tpu as pltpu


def make_graphcon_gat_kernel(N, H, C, nlayers, dt, alpha, gamma):
    """Build the Pallas kernel body for fixed static shapes."""
    HC = H * C
    f32 = jnp.float32
    bf16 = jnp.bfloat16

    def kernel(x_ref, bias_ref,
               w_enc_ref, b_enc_ref,
               w_gat_ref, w_res_ref, b_sum_ref,
               asrc_t_ref, adst_ref, avg_ref,
               w_dec_ref, b_dec_ref,
               out_ref):
        # Loop-invariant additive adjacency bias (0 on edges, -1e30 elsewhere).
        bias = bias_ref[...]                               # (N, N) f32

        # bf16 matmul operands (native MXU path); f32 accumulation everywhere.
        w_enc = w_enc_ref[...]                             # (F, C)   bf16
        w_gat = w_gat_ref[...]                             # (C, HC)  bf16
        w_res = w_res_ref[...]                             # (C, HC)  bf16
        asrc_t = asrc_t_ref[...]                           # (H, HC)  bf16
        adst = adst_ref[...]                               # (HC, H)  bf16
        avg_m = avg_ref[...]                               # (HC, C)  bf16
        w_dec = w_dec_ref[...]                             # (C, PAD) bf16

        b_enc = b_enc_ref[...]                             # (1, C)   f32
        b_dec = b_dec_ref[...]                             # (1, PAD) f32
        # Hoisted once: JAX does not CSE broadcast_in_dim across layers.
        b_sum = jnp.broadcast_to(b_sum_ref[...], (N, HC))  # b_gat + b_res

        # --- encoder + ReLU ---------------------------------------------------
        x_bf = x_ref[...].astype(bf16)
        Y = jnp.maximum(
            jnp.dot(x_bf, w_enc, preferred_element_type=f32) + b_enc, 0.0)
        X = Y

        # --- GraphCON layer loop (static Python loop; nlayers is tiny) --------
        for _ in range(nlayers):
            X_bf = X.astype(bf16)
            # GAT projection and residual projection as two separate small
            # matmuls (avoids the 64/64 mid-lane-tile split of a fused 128-wide
            # product at HC < 128).
            xp = jnp.dot(X_bf, w_gat, preferred_element_type=f32)      # (N, HC)
            xp_bf = xp.astype(bf16)
            res_proj = jnp.dot(X_bf, w_res, preferred_element_type=f32)

            # Attention coefficients: a_dst as columns (N, H); a_src produced
            # already transposed (H, N) so the per-head broadcast is a free
            # sublane-broadcast of a row.
            a_dst = jnp.dot(xp_bf, adst, preferred_element_type=f32)   # (N, H)
            a_srcT = lax.dot_general(
                asrc_t, xp_bf,
                dimension_numbers=(((1,), (1,)), ((), ())),
                preferred_element_type=f32)                            # (H, N)

            msgs = []
            for h in range(H):  # H is small & static
                # logits[i, j] = a_dst[i, h] + a_src[j, h]
                logits = a_dst[:, h:h + 1] + a_srcT[h:h + 1, :]        # (N, N)
                e = jnp.where(logits > 0, logits, 0.2 * logits)        # LeakyReLU(0.2)
                masked = e + bias                                      # additive mask
                mrow = jnp.max(masked, axis=-1, keepdims=True)
                p = jnp.exp(masked - mrow)       # exactly 0 on masked entries
                rowsum = jnp.sum(p, axis=-1, keepdims=True)
                # Unnormalized message passing (bf16 MXU), normalize the small
                # (N, C) result afterwards instead of the (N, N) matrix.
                msg = jnp.dot(p.astype(bf16), xp_bf[:, h * C:(h + 1) * C],
                              preferred_element_type=f32)              # (N, C)
                msgs.append(msg * pl.reciprocal(rowsum, approx=True))

            # GATConv output (+ folded GAT & residual biases) + residual branch.
            z = jnp.concatenate(msgs, axis=-1) + res_proj + b_sum      # (N, HC)
            elu = jnp.where(z > 0, z, jnp.exp(z) - 1.0)                # F.elu, alpha=1
            # exact equivalent of .view(N, nhid, H).mean(-1)
            mean_z = jnp.dot(elu.astype(bf16), avg_m,
                             preferred_element_type=f32)               # (N, C)

            Y = Y + dt * (mean_z - alpha * Y - gamma * X)
            X = X + dt * Y

        # --- decoder (lane-dense padded output slab) ---------------------------
        out_ref[...] = (jnp.dot(X.astype(bf16), w_dec, preferred_element_type=f32)
                        + b_dec).astype(out_ref.dtype)

    return kernel


def graphcon_gat_forward(x, adj, params, *, nheads, nlayers, dt, alpha, gamma):
    N, nfeat = x.shape
    H = nheads
    nhid = params["w_enc"].shape[1]
    C = nhid
    HC = H * C
    nclass = params["w_dec"].shape[1]
    f32 = jnp.float32
    bf16 = jnp.bfloat16

    # ---- host-side layout prep (cheap, constant-folded under jit) ------------
    # Additive adjacency bias: 0 on edges, -1e30 off-edge (exp underflows to 0).
    adj_bias = (adj.astype(f32) - 1.0) * 1e30
    # Fold the two biases that are always added together.
    b_sum = params["b_gat"] + params["b_res"]                   # (1, HC)
    # bf16 weights for the MXU path (f32 accumulation in-kernel).
    w_enc_bf = params["w_enc"].astype(bf16)
    w_gat_bf = params["w_gat"].astype(bf16)
    w_res_bf = params["w_res"].astype(bf16)
    asrc_t_bf = params["asrc_mat"].T.astype(bf16)               # (H, HC)
    adst_bf = params["adst_mat"].astype(bf16)                   # (HC, H)
    avg_bf = params["avg_mat"].astype(bf16)                     # (HC, C)
    # Lane-dense decoder: pad output width to a multiple of 128.
    pad_cls = max(128, ((nclass + 127) // 128) * 128)
    w_dec_pad = jnp.zeros((nhid, pad_cls), bf16).at[:, :nclass].set(
        params["w_dec"].astype(bf16))
    b_dec_pad = jnp.zeros((1, pad_cls), f32).at[:, :nclass].set(params["b_dec"])

    kernel = make_graphcon_gat_kernel(N, H, C, nlayers, dt, alpha, gamma)

    args = (x, adj_bias,
            w_enc_bf, params["b_enc"],
            w_gat_bf, w_res_bf, b_sum,
            asrc_t_bf, adst_bf, avg_bf,
            w_dec_pad, b_dec_pad)

    # ---- cost estimate (helps XLA schedule around a long custom call) --------
    flops_layer = (4 * N * C * HC            # GAT + residual projections
                   + 4 * N * HC * H          # attention coefficients
                   + H * 2 * N * N * C       # per-head message passing
                   + 2 * N * HC * C          # head averaging
                   + 12 * H * N * N)         # softmax / mask elementwise (rough)
    flops = 2 * N * nfeat * C + nlayers * flops_layer + 2 * N * C * pad_cls
    transcendentals = nlayers * (H * N * N + N * HC)
    arg_bytes = sum(int(a.size) * a.dtype.itemsize for a in args)
    bytes_accessed = arg_bytes + N * pad_cls * 4
    cost = pl.CostEstimate(flops=int(flops),
                           transcendentals=int(transcendentals),
                           bytes_accessed=int(bytes_accessed))

    # ---- VMEM limit from actual footprint, capped below v7x's 64 MiB ---------
    work_bytes = 6 * N * N * 4 + 10 * N * HC * 4 + N * pad_cls * 4
    vmem_limit = int(min(48 << 20,
                         max(24 << 20, 2 * arg_bytes + work_bytes + (4 << 20))))

    out_pad = pl.pallas_call(
        kernel,
        out_shape=jax.ShapeDtypeStruct((N, pad_cls), jnp.float32),
        in_specs=[pl.BlockSpec(memory_space=pltpu.MemorySpace.VMEM)] * len(args),
        out_specs=pl.BlockSpec(memory_space=pltpu.MemorySpace.VMEM),
        compiler_params=pltpu.CompilerParams(vmem_limit_bytes=vmem_limit),
        cost_estimate=cost,
    )(*args)
    return out_pad[:, :nclass]


def init_params(key, nfeat, nhid, nclass, nheads):
    """Deterministic synthetic parameters matching the nn.Module shapes."""
    f32 = jnp.float32
    ks = jax.random.split(key, 10)

    def lin(kw, fan_in, fan_out):
        s = 1.0 / math.sqrt(fan_in)
        w = jax.random.uniform(kw, (fan_in, fan_out), f32, -s, s)
        b = jnp.zeros((1, fan_out), f32)
        return w, b

    H, C = nheads, nhid
    w_enc, b_enc = lin(ks[0], nfeat, nhid)                 # enc: Linear(nfeat, nhid)
    w_res, b_res = lin(ks[1], nhid, H * nhid)              # res: Linear(nhid, H*nhid)
    w_dec, b_dec = lin(ks[2], nhid, nclass)                # dec: Linear(nhid, nclass)

    # GATConv(nhid, nhid, heads=H): lin (no bias), att_src/att_dst (1,H,C), bias (H*C)
    s = 1.0 / math.sqrt(nhid)
    w_gat = jax.random.uniform(ks[3], (nhid, H * C), f32, -s, s)
    b_gat = jnp.zeros((1, H * C), f32)
    att_src = jax.random.uniform(ks[4], (H, C), f32, -s, s)
    att_dst = jax.random.uniform(ks[5], (H, C), f32, -s, s)

    eye_h = jnp.eye(H, dtype=f32)
    # (H*C, H) block matrix so that  xp @ asrc_mat == (xp.view(N,H,C) * att_src).sum(-1)
    asrc_mat = (att_src[:, :, None] * eye_h[:, None, :]).reshape(H * C, H)
    adst_mat = (att_dst[:, :, None] * eye_h[:, None, :]).reshape(H * C, H)

    # (H*C, C) matrix implementing .view(N, C, H).mean(-1) on the flat (N, H*C)
    # array (faithfully reproduces the reference code's head-scrambled average).
    avg_mat = jnp.repeat(jnp.eye(C, dtype=f32), H, axis=0) / float(H)

    return dict(w_enc=w_enc, b_enc=b_enc,
                w_gat=w_gat, b_gat=b_gat, asrc_mat=asrc_mat, adst_mat=adst_mat,
                w_res=w_res, b_res=b_res,
                avg_mat=avg_mat,
                w_dec=w_dec, b_dec=b_dec)


def build_ring_adjacency(N):
    """Dense adjacency for a bidirectional ring graph + self loops.
    adj[i, j] = 1.0 iff there is an edge j -> i.  Self loops guarantee every
    row has at least one edge, which the masked softmax relies on."""
    src = jnp.concatenate([jnp.arange(N), jnp.arange(N)])
    dst = jnp.concatenate([(jnp.arange(N) + 1) % N, (jnp.arange(N) - 1) % N])
    adj = jnp.zeros((N, N), jnp.float32).at[dst, src].set(1.0)
    adj = adj.at[jnp.arange(N), jnp.arange(N)].set(1.0)   # GATConv add_self_loops
    return adj


if __name__ == "__main__":
    # Small, module-consistent shapes.
    N_NODES = 32
    NFEAT, NHID, NCLASS = 16, 16, 8
    NHEADS, NLAYERS = 4, 2
    DT, ALPHA, GAMMA = 1.0, 1.0, 1.0

    key = jax.random.PRNGKey(0)
    k_x, k_p = jax.random.split(key)

    x = jax.random.normal(k_x, (N_NODES, NFEAT), jnp.float32)
    adj = build_ring_adjacency(N_NODES)
    params = init_params(k_p, NFEAT, NHID, NCLASS, NHEADS)

    fwd = functools.partial(graphcon_gat_forward,
                            nheads=NHEADS, nlayers=NLAYERS,
                            dt=DT, alpha=ALPHA, gamma=GAMMA)
    out = jax.jit(lambda x, a: fwd(x, a, params))(x, adj)
    out = jax.block_until_ready(out)

    assert out.shape == (N_NODES, NCLASS), out.shape
    assert bool(jnp.isfinite(out).all()), "non-finite output"
    print("KERNEL_OK")
</pallas_src>

<mosaic_0001>
module attributes {stable_mosaic.version = 11 : i64} {
  func.func @kernel(%arg0: memref<32x16xf32, #tpu.memory_space<vmem>>, %arg1: memref<32x32xf32, #tpu.memory_space<vmem>>, %arg2: memref<16x16xbf16, #tpu.memory_space<vmem>>, %arg3: memref<1x16xf32, #tpu.memory_space<vmem>>, %arg4: memref<16x64xbf16, #tpu.memory_space<vmem>>, %arg5: memref<16x64xbf16, #tpu.memory_space<vmem>>, %arg6: memref<1x64xf32, #tpu.memory_space<vmem>>, %arg7: memref<4x64xbf16, #tpu.memory_space<vmem>>, %arg8: memref<64x4xbf16, #tpu.memory_space<vmem>>, %arg9: memref<64x16xbf16, #tpu.memory_space<vmem>>, %arg10: memref<16x128xbf16, #tpu.memory_space<vmem>>, %arg11: memref<1x128xf32, #tpu.memory_space<vmem>>, %arg12: memref<32x128xf32, #tpu.memory_space<vmem>>) attributes {dimension_semantics = [], scalar_prefetch = 0 : i64, scratch_operands = 0 : i64, tpu.core_type = #tpu.core_type<tc>} {
    %c0 = arith.constant 0 : index
    %c0_0 = arith.constant 0 : index
    %0 = vector.load %arg1[%c0, %c0_0] : memref<32x32xf32, #tpu.memory_space<vmem>>, vector<32x32xf32>
    %c0_1 = arith.constant 0 : index
    %c0_2 = arith.constant 0 : index
    %1 = vector.load %arg2[%c0_1, %c0_2] : memref<16x16xbf16, #tpu.memory_space<vmem>>, vector<16x16xbf16>
    %c0_3 = arith.constant 0 : index
    %c0_4 = arith.constant 0 : index
    %2 = vector.load %arg4[%c0_3, %c0_4] : memref<16x64xbf16, #tpu.memory_space<vmem>>, vector<16x64xbf16>
    %c0_5 = arith.constant 0 : index
    %c0_6 = arith.constant 0 : index
    %3 = vector.load %arg5[%c0_5, %c0_6] : memref<16x64xbf16, #tpu.memory_space<vmem>>, vector<16x64xbf16>
    %c0_7 = arith.constant 0 : index
    %c0_8 = arith.constant 0 : index
    %4 = vector.load %arg7[%c0_7, %c0_8] : memref<4x64xbf16, #tpu.memory_space<vmem>>, vector<4x64xbf16>
    %c0_9 = arith.constant 0 : index
    %c0_10 = arith.constant 0 : index
    %5 = vector.load %arg8[%c0_9, %c0_10] : memref<64x4xbf16, #tpu.memory_space<vmem>>, vector<64x4xbf16>
    %c0_11 = arith.constant 0 : index
    %c0_12 = arith.constant 0 : index
    %6 = vector.load %arg9[%c0_11, %c0_12] : memref<64x16xbf16, #tpu.memory_space<vmem>>, vector<64x16xbf16>
    %c0_13 = arith.constant 0 : index
    %c0_14 = arith.constant 0 : index
    %7 = vector.load %arg10[%c0_13, %c0_14] : memref<16x128xbf16, #tpu.memory_space<vmem>>, vector<16x128xbf16>
    %c0_15 = arith.constant 0 : index
    %c0_16 = arith.constant 0 : index
    %8 = vector.load %arg3[%c0_15, %c0_16] : memref<1x16xf32, #tpu.memory_space<vmem>>, vector<1x16xf32>
    %c0_17 = arith.constant 0 : index
    %c0_18 = arith.constant 0 : index
    %9 = vector.load %arg11[%c0_17, %c0_18] : memref<1x128xf32, #tpu.memory_space<vmem>>, vector<1x128xf32>
    %c0_19 = arith.constant 0 : index
    %c0_20 = arith.constant 0 : index
    %10 = vector.load %arg6[%c0_19, %c0_20] : memref<1x64xf32, #tpu.memory_space<vmem>>, vector<1x64xf32>
    %11 = vector.shape_cast %10 : vector<1x64xf32> to vector<1x64xf32>
    %12 = vector.broadcast %11 : vector<1x64xf32> to vector<32x64xf32>
    %c0_21 = arith.constant 0 : index
    %c0_22 = arith.constant 0 : index
    %13 = vector.load %arg0[%c0_21, %c0_22] : memref<32x16xf32, #tpu.memory_space<vmem>>, vector<32x16xf32>
    %14 = arith.truncf %13 : vector<32x16xf32> to vector<32x16xbf16>
    %cst = arith.constant dense<0.000000e+00> : vector<32x16xf32>
    %15 = tpu.matmul %14, %1, %cst {dimension_numbers = #tpu.dot_dimension_numbers<[1], [0], [0], [1], [0, 0, 1, 1], [], []>} : vector<32x16xbf16>, vector<16x16xbf16>, vector<32x16xf32> -> vector<32x16xf32>
    %16 = vector.broadcast %8 : vector<1x16xf32> to vector<32x16xf32>
    %17 = arith.addf %15, %16 : vector<32x16xf32>
    %cst_23 = arith.constant 0.000000e+00 : f32
    %18 = vector.broadcast %cst_23 : f32 to vector<32x16xf32>
    %19 = arith.maximumf %17, %18 : vector<32x16xf32>
    %20 = arith.truncf %19 : vector<32x16xf32> to vector<32x16xbf16>
    %cst_24 = arith.constant dense<0.000000e+00> : vector<32x64xf32>
    %21 = tpu.matmul %20, %2, %cst_24 {dimension_numbers = #tpu.dot_dimension_numbers<[1], [0], [0], [1], [0, 0, 1, 1], [], []>} : vector<32x16xbf16>, vector<16x64xbf16>, vector<32x64xf32> -> vector<32x64xf32>
    %22 = arith.truncf %21 : vector<32x64xf32> to vector<32x64xbf16>
    %cst_25 = arith.constant dense<0.000000e+00> : vector<32x64xf32>
    %23 = tpu.matmul %20, %3, %cst_25 {dimension_numbers = #tpu.dot_dimension_numbers<[1], [0], [0], [1], [0, 0, 1, 1], [], []>} : vector<32x16xbf16>, vector<16x64xbf16>, vector<32x64xf32> -> vector<32x64xf32>
    %cst_26 = arith.constant dense<0.000000e+00> : vector<32x4xf32>
    %24 = tpu.matmul %22, %5, %cst_26 {dimension_numbers = #tpu.dot_dimension_numbers<[1], [0], [0], [1], [0, 0, 1, 1], [], []>} : vector<32x64xbf16>, vector<64x4xbf16>, vector<32x4xf32> -> vector<32x4xf32>
    %cst_27 = arith.constant dense<0.000000e+00> : vector<4x32xf32>
    %25 = tpu.matmul %4, %22, %cst_27 {dimension_numbers = #tpu.dot_dimension_numbers<[1], [1], [0], [0], [0, 0, 1, 0], [], []>} : vector<4x64xbf16>, vector<32x64xbf16>, vector<4x32xf32> -> vector<4x32xf32>
    %26 = vector.extract_strided_slice %24 {offsets = [0, 0], sizes = [32, 1], strides = [1, 1]} : vector<32x4xf32> to vector<32x1xf32>
    %27 = vector.extract_strided_slice %25 {offsets = [0, 0], sizes = [1, 32], strides = [1, 1]} : vector<4x32xf32> to vector<1x32xf32>
    %28 = vector.broadcast %26 : vector<32x1xf32> to vector<32x32xf32>
    %29 = vector.broadcast %27 : vector<1x32xf32> to vector<32x32xf32>
    %30 = arith.addf %28, %29 : vector<32x32xf32>
    %cst_28 = arith.constant 0.000000e+00 : f32
    %31 = vector.broadcast %cst_28 : f32 to vector<32x32xf32>
    %32 = arith.cmpf ogt, %30, %31 : vector<32x32xf32>
    %cst_29 = arith.constant 2.000000e-01 : f32
    %33 = vector.broadcast %cst_29 : f32 to vector<32x32xf32>
    %34 = arith.mulf %33, %30 : vector<32x32xf32>
    %35 = arith.select %32, %30, %34 : vector<32x32xi1>, vector<32x32xf32>
    %36 = arith.addf %35, %0 : vector<32x32xf32>
    %cst_30 = arith.constant dense<0xFF800000> : vector<32xf32>
    %37 = vector.multi_reduction <maximumf>, %36, %cst_30 [1] : vector<32x32xf32> to vector<32xf32>
    %38 = vector.shape_cast %37 : vector<32xf32> to vector<32x1xf32>
    %39 = vector.broadcast %38 : vector<32x1xf32> to vector<32x32xf32>
    %40 = arith.subf %36, %39 : vector<32x32xf32>
    %41 = math.exp %40 : vector<32x32xf32>
    %cst_31 = arith.constant dense<0.000000e+00> : vector<32xf32>
    %42 = vector.multi_reduction <add>, %41, %cst_31 [1] : vector<32x32xf32> to vector<32xf32>
    %43 = vector.shape_cast %42 : vector<32xf32> to vector<32x1xf32>
    %44 = arith.truncf %41 : vector<32x32xf32> to vector<32x32xbf16>
    %45 = vector.extract_strided_slice %22 {offsets = [0, 0], sizes = [32, 16], strides = [1, 1]} : vector<32x64xbf16> to vector<32x16xbf16>
    %cst_32 = arith.constant dense<0.000000e+00> : vector<32x16xf32>
    %46 = tpu.matmul %44, %45, %cst_32 {dimension_numbers = #tpu.dot_dimension_numbers<[1], [0], [0], [1], [0, 0, 1, 1], [], []>} : vector<32x32xbf16>, vector<32x16xbf16>, vector<32x16xf32> -> vector<32x16xf32>
    %47 = tpu.reciprocal %43 {approx = true} : vector<32x1xf32> -> vector<32x1xf32>
    %48 = vector.broadcast %47 : vector<32x1xf32> to vector<32x16xf32>
    %49 = arith.mulf %46, %48 : vector<32x16xf32>
    %50 = vector.extract_strided_slice %24 {offsets = [0, 1], sizes = [32, 1], strides = [1, 1]} : vector<32x4xf32> to vector<32x1xf32>
    %51 = vector.extract_strided_slice %25 {offsets = [1, 0], sizes = [1, 32], strides = [1, 1]} : vector<4x32xf32> to vector<1x32xf32>
    %52 = vector.broadcast %50 : vector<32x1xf32> to vector<32x32xf32>
    %53 = vector.broadcast %51 : vector<1x32xf32> to vector<32x32xf32>
    %54 = arith.addf %52, %53 : vector<32x32xf32>
    %cst_33 = arith.constant 0.000000e+00 : f32
    %55 = vector.broadcast %cst_33 : f32 to vector<32x32xf32>
    %56 = arith.cmpf ogt, %54, %55 : vector<32x32xf32>
    %cst_34 = arith.constant 2.000000e-01 : f32
    %57 = vector.broadcast %cst_34 : f32 to vector<32x32xf32>
    %58 = arith.mulf %57, %54 : vector<32x32xf32>
    %59 = arith.select %56, %54, %58 : vector<32x32xi1>, vector<32x32xf32>
    %60 = arith.addf %59, %0 : vector<32x32xf32>
    %cst_35 = arith.constant dense<0xFF800000> : vector<32xf32>
    %61 = vector.multi_reduction <maximumf>, %60, %cst_35 [1] : vector<32x32xf32> to vector<32xf32>
    %62 = vector.shape_cast %61 : vector<32xf32> to vector<32x1xf32>
    %63 = vector.broadcast %62 : vector<32x1xf32> to vector<32x32xf32>
    %64 = arith.subf %60, %63 : vector<32x32xf32>
    %65 = math.exp %64 : vector<32x32xf32>
    %cst_36 = arith.constant dense<0.000000e+00> : vector<32xf32>
    %66 = vector.multi_reduction <add>, %65, %cst_36 [1] : vector<32x32xf32> to vector<32xf32>
    %67 = vector.shape_cast %66 : vector<32xf32> to vector<32x1xf32>
    %68 = arith.truncf %65 : vector<32x32xf32> to vector<32x32xbf16>
    %69 = vector.extract_strided_slice %22 {offsets = [0, 16], sizes = [32, 16], strides = [1, 1]} : vector<32x64xbf16> to vector<32x16xbf16>
    %cst_37 = arith.constant dense<0.000000e+00> : vector<32x16xf32>
    %70 = tpu.matmul %68, %69, %cst_37 {dimension_numbers = #tpu.dot_dimension_numbers<[1], [0], [0], [1], [0, 0, 1, 1], [], []>} : vector<32x32xbf16>, vector<32x16xbf16>, vector<32x16xf32> -> vector<32x16xf32>
    %71 = tpu.reciprocal %67 {approx = true} : vector<32x1xf32> -> vector<32x1xf32>
    %72 = vector.broadcast %71 : vector<32x1xf32> to vector<32x16xf32>
    %73 = arith.mulf %70, %72 : vector<32x16xf32>
    %74 = vector.extract_strided_slice %24 {offsets = [0, 2], sizes = [32, 1], strides = [1, 1]} : vector<32x4xf32> to vector<32x1xf32>
    %75 = vector.extract_strided_slice %25 {offsets = [2, 0], sizes = [1, 32], strides = [1, 1]} : vector<4x32xf32> to vector<1x32xf32>
    %76 = vector.broadcast %74 : vector<32x1xf32> to vector<32x32xf32>
    %77 = vector.broadcast %75 : vector<1x32xf32> to vector<32x32xf32>
    %78 = arith.addf %76, %77 : vector<32x32xf32>
    %cst_38 = arith.constant 0.000000e+00 : f32
    %79 = vector.broadcast %cst_38 : f32 to vector<32x32xf32>
    %80 = arith.cmpf ogt, %78, %79 : vector<32x32xf32>
    %cst_39 = arith.constant 2.000000e-01 : f32
    %81 = vector.broadcast %cst_39 : f32 to vector<32x32xf32>
    %82 = arith.mulf %81, %78 : vector<32x32xf32>
    %83 = arith.select %80, %78, %82 : vector<32x32xi1>, vector<32x32xf32>
    %84 = arith.addf %83, %0 : vector<32x32xf32>
    %cst_40 = arith.constant dense<0xFF800000> : vector<32xf32>
    %85 = vector.multi_reduction <maximumf>, %84, %cst_40 [1] : vector<32x32xf32> to vector<32xf32>
    %86 = vector.shape_cast %85 : vector<32xf32> to vector<32x1xf32>
    %87 = vector.broadcast %86 : vector<32x1xf32> to vector<32x32xf32>
    %88 = arith.subf %84, %87 : vector<32x32xf32>
    %89 = math.exp %88 : vector<32x32xf32>
    %cst_41 = arith.constant dense<0.000000e+00> : vector<32xf32>
    %90 = vector.multi_reduction <add>, %89, %cst_41 [1] : vector<32x32xf32> to vector<32xf32>
    %91 = vector.shape_cast %90 : vector<32xf32> to vector<32x1xf32>
    %92 = arith.truncf %89 : vector<32x32xf32> to vector<32x32xbf16>
    %93 = vector.extract_strided_slice %22 {offsets = [0, 32], sizes = [32, 16], strides = [1, 1]} : vector<32x64xbf16> to vector<32x16xbf16>
    %cst_42 = arith.constant dense<0.000000e+00> : vector<32x16xf32>
    %94 = tpu.matmul %92, %93, %cst_42 {dimension_numbers = #tpu.dot_dimension_numbers<[1], [0], [0], [1], [0, 0, 1, 1], [], []>} : vector<32x32xbf16>, vector<32x16xbf16>, vector<32x16xf32> -> vector<32x16xf32>
    %95 = tpu.reciprocal %91 {approx = true} : vector<32x1xf32> -> vector<32x1xf32>
    %96 = vector.broadcast %95 : vector<32x1xf32> to vector<32x16xf32>
    %97 = arith.mulf %94, %96 : vector<32x16xf32>
    %98 = vector.extract_strided_slice %24 {offsets = [0, 3], sizes = [32, 1], strides = [1, 1]} : vector<32x4xf32> to vector<32x1xf32>
    %99 = vector.extract_strided_slice %25 {offsets = [3, 0], sizes = [1, 32], strides = [1, 1]} : vector<4x32xf32> to vector<1x32xf32>
    %100 = vector.broadcast %98 : vector<32x1xf32> to vector<32x32xf32>
    %101 = vector.broadcast %99 : vector<1x32xf32> to vector<32x32xf32>
    %102 = arith.addf %100, %101 : vector<32x32xf32>
    %cst_43 = arith.constant 0.000000e+00 : f32
    %103 = vector.broadcast %cst_43 : f32 to vector<32x32xf32>
    %104 = arith.cmpf ogt, %102, %103 : vector<32x32xf32>
    %cst_44 = arith.constant 2.000000e-01 : f32
    %105 = vector.broadcast %cst_44 : f32 to vector<32x32xf32>
    %106 = arith.mulf %105, %102 : vector<32x32xf32>
    %107 = arith.select %104, %102, %106 : vector<32x32xi1>, vector<32x32xf32>
    %108 = arith.addf %107, %0 : vector<32x32xf32>
    %cst_45 = arith.constant dense<0xFF800000> : vector<32xf32>
    %109 = vector.multi_reduction <maximumf>, %108, %cst_45 [1] : vector<32x32xf32> to vector<32xf32>
    %110 = vector.shape_cast %109 : vector<32xf32> to vector<32x1xf32>
    %111 = vector.broadcast %110 : vector<32x1xf32> to vector<32x32xf32>
    %112 = arith.subf %108, %111 : vector<32x32xf32>
    %113 = math.exp %112 : vector<32x32xf32>
    %cst_46 = arith.constant dense<0.000000e+00> : vector<32xf32>
    %114 = vector.multi_reduction <add>, %113, %cst_46 [1] : vector<32x32xf32> to vector<32xf32>
    %115 = vector.shape_cast %114 : vector<32xf32> to vector<32x1xf32>
    %116 = arith.truncf %113 : vector<32x32xf32> to vector<32x32xbf16>
    %117 = vector.extract_strided_slice %22 {offsets = [0, 48], sizes = [32, 16], strides = [1, 1]} : vector<32x64xbf16> to vector<32x16xbf16>
    %cst_47 = arith.constant dense<0.000000e+00> : vector<32x16xf32>
    %118 = tpu.matmul %116, %117, %cst_47 {dimension_numbers = #tpu.dot_dimension_numbers<[1], [0], [0], [1], [0, 0, 1, 1], [], []>} : vector<32x32xbf16>, vector<32x16xbf16>, vector<32x16xf32> -> vector<32x16xf32>
    %119 = tpu.reciprocal %115 {approx = true} : vector<32x1xf32> -> vector<32x1xf32>
    %120 = vector.broadcast %119 : vector<32x1xf32> to vector<32x16xf32>
    %121 = arith.mulf %118, %120 : vector<32x16xf32>
    %122 = tpu.concatenate %49, %73, %97, %121 in 1 : vector<32x16xf32>, vector<32x16xf32>, vector<32x16xf32>, vector<32x16xf32> -> vector<32x64xf32>
    %123 = arith.addf %122, %23 : vector<32x64xf32>
    %124 = arith.addf %123, %12 : vector<32x64xf32>
    %cst_48 = arith.constant 0.000000e+00 : f32
    %125 = vector.broadcast %cst_48 : f32 to vector<32x64xf32>
    %126 = arith.cmpf ogt, %124, %125 : vector<32x64xf32>
    %127 = math.exp %124 : vector<32x64xf32>
    %cst_49 = arith.constant 1.000000e+00 : f32
    %128 = vector.broadcast %cst_49 : f32 to vector<32x64xf32>
    %129 = arith.subf %127, %128 : vector<32x64xf32>
    %130 = arith.select %126, %124, %129 : vector<32x64xi1>, vector<32x64xf32>
    %131 = arith.truncf %130 : vector<32x64xf32> to vector<32x64xbf16>
    %cst_50 = arith.constant dense<0.000000e+00> : vector<32x16xf32>
    %132 = tpu.matmul %131, %6, %cst_50 {dimension_numbers = #tpu.dot_dimension_numbers<[1], [0], [0], [1], [0, 0, 1, 1], [], []>} : vector<32x64xbf16>, vector<64x16xbf16>, vector<32x16xf32> -> vector<32x16xf32>
    %cst_51 = arith.constant 1.000000e+00 : f32
    %133 = vector.broadcast %cst_51 : f32 to vector<32x16xf32>
    %134 = arith.mulf %133, %19 : vector<32x16xf32>
    %135 = arith.subf %132, %134 : vector<32x16xf32>
    %cst_52 = arith.constant 1.000000e+00 : f32
    %136 = vector.broadcast %cst_52 : f32 to vector<32x16xf32>
    %137 = arith.mulf %136, %19 : vector<32x16xf32>
    %138 = arith.subf %135, %137 : vector<32x16xf32>
    %cst_53 = arith.constant 1.000000e+00 : f32
    %139 = vector.broadcast %cst_53 : f32 to vector<32x16xf32>
    %140 = arith.mulf %139, %138 : vector<32x16xf32>
    %141 = arith.addf %19, %140 : vector<32x16xf32>
    %cst_54 = arith.constant 1.000000e+00 : f32
    %142 = vector.broadcast %cst_54 : f32 to vector<32x16xf32>
    %143 = arith.mulf %142, %141 : vector<32x16xf32>
    %144 = arith.addf %19, %143 : vector<32x16xf32>
    %145 = arith.truncf %144 : vector<32x16xf32> to vector<32x16xbf16>
    %cst_55 = arith.constant dense<0.000000e+00> : vector<32x64xf32>
    %146 = tpu.matmul %145, %2, %cst_55 {dimension_numbers = #tpu.dot_dimension_numbers<[1], [0], [0], [1], [0, 0, 1, 1], [], []>} : vector<32x16xbf16>, vector<16x64xbf16>, vector<32x64xf32> -> vector<32x64xf32>
    %147 = arith.truncf %146 : vector<32x64xf32> to vector<32x64xbf16>
    %cst_56 = arith.constant dense<0.000000e+00> : vector<32x64xf32>
    %148 = tpu.matmul %145, %3, %cst_56 {dimension_numbers = #tpu.dot_dimension_numbers<[1], [0], [0], [1], [0, 0, 1, 1], [], []>} : vector<32x16xbf16>, vector<16x64xbf16>, vector<32x64xf32> -> vector<32x64xf32>
    %cst_57 = arith.constant dense<0.000000e+00> : vector<32x4xf32>
    %149 = tpu.matmul %147, %5, %cst_57 {dimension_numbers = #tpu.dot_dimension_numbers<[1], [0], [0], [1], [0, 0, 1, 1], [], []>} : vector<32x64xbf16>, vector<64x4xbf16>, vector<32x4xf32> -> vector<32x4xf32>
    %cst_58 = arith.constant dense<0.000000e+00> : vector<4x32xf32>
    %150 = tpu.matmul %4, %147, %cst_58 {dimension_numbers = #tpu.dot_dimension_numbers<[1], [1], [0], [0], [0, 0, 1, 0], [], []>} : vector<4x64xbf16>, vector<32x64xbf16>, vector<4x32xf32> -> vector<4x32xf32>
    %151 = vector.extract_strided_slice %149 {offsets = [0, 0], sizes = [32, 1], strides = [1, 1]} : vector<32x4xf32> to vector<32x1xf32>
    %152 = vector.extract_strided_slice %150 {offsets = [0, 0], sizes = [1, 32], strides = [1, 1]} : vector<4x32xf32> to vector<1x32xf32>
    %153 = vector.broadcast %151 : vector<32x1xf32> to vector<32x32xf32>
    %154 = vector.broadcast %152 : vector<1x32xf32> to vector<32x32xf32>
    %155 = arith.addf %153, %154 : vector<32x32xf32>
    %cst_59 = arith.constant 0.000000e+00 : f32
    %156 = vector.broadcast %cst_59 : f32 to vector<32x32xf32>
    %157 = arith.cmpf ogt, %155, %156 : vector<32x32xf32>
    %cst_60 = arith.constant 2.000000e-01 : f32
    %158 = vector.broadcast %cst_60 : f32 to vector<32x32xf32>
    %159 = arith.mulf %158, %155 : vector<32x32xf32>
    %160 = arith.select %157, %155, %159 : vector<32x32xi1>, vector<32x32xf32>
    %161 = arith.addf %160, %0 : vector<32x32xf32>
    %cst_61 = arith.constant dense<0xFF800000> : vector<32xf32>
    %162 = vector.multi_reduction <maximumf>, %161, %cst_61 [1] : vector<32x32xf32> to vector<32xf32>
    %163 = vector.shape_cast %162 : vector<32xf32> to vector<32x1xf32>
    %164 = vector.broadcast %163 : vector<32x1xf32> to vector<32x32xf32>
    %165 = arith.subf %161, %164 : vector<32x32xf32>
    %166 = math.exp %165 : vector<32x32xf32>
    %cst_62 = arith.constant dense<0.000000e+00> : vector<32xf32>
    %167 = vector.multi_reduction <add>, %166, %cst_62 [1] : vector<32x32xf32> to vector<32xf32>
    %168 = vector.shape_cast %167 : vector<32xf32> to vector<32x1xf32>
    %169 = arith.truncf %166 : vector<32x32xf32> to vector<32x32xbf16>
    %170 = vector.extract_strided_slice %147 {offsets = [0, 0], sizes = [32, 16], strides = [1, 1]} : vector<32x64xbf16> to vector<32x16xbf16>
    %cst_63 = arith.constant dense<0.000000e+00> : vector<32x16xf32>
    %171 = tpu.matmul %169, %170, %cst_63 {dimension_numbers = #tpu.dot_dimension_numbers<[1], [0], [0], [1], [0, 0, 1, 1], [], []>} : vector<32x32xbf16>, vector<32x16xbf16>, vector<32x16xf32> -> vector<32x16xf32>
    %172 = tpu.reciprocal %168 {approx = true} : vector<32x1xf32> -> vector<32x1xf32>
    %173 = vector.broadcast %172 : vector<32x1xf32> to vector<32x16xf32>
    %174 = arith.mulf %171, %173 : vector<32x16xf32>
    %175 = vector.extract_strided_slice %149 {offsets = [0, 1], sizes = [32, 1], strides = [1, 1]} : vector<32x4xf32> to vector<32x1xf32>
    %176 = vector.extract_strided_slice %150 {offsets = [1, 0], sizes = [1, 32], strides = [1, 1]} : vector<4x32xf32> to vector<1x32xf32>
    %177 = vector.broadcast %175 : vector<32x1xf32> to vector<32x32xf32>
    %178 = vector.broadcast %176 : vector<1x32xf32> to vector<32x32xf32>
    %179 = arith.addf %177, %178 : vector<32x32xf32>
    %cst_64 = arith.constant 0.000000e+00 : f32
    %180 = vector.broadcast %cst_64 : f32 to vector<32x32xf32>
    %181 = arith.cmpf ogt, %179, %180 : vector<32x32xf32>
    %cst_65 = arith.constant 2.000000e-01 : f32
    %182 = vector.broadcast %cst_65 : f32 to vector<32x32xf32>
    %183 = arith.mulf %182, %179 : vector<32x32xf32>
    %184 = arith.select %181, %179, %183 : vector<32x32xi1>, vector<32x32xf32>
    %185 = arith.addf %184, %0 : vector<32x32xf32>
    %cst_66 = arith.constant dense<0xFF800000> : vector<32xf32>
    %186 = vector.multi_reduction <maximumf>, %185, %cst_66 [1] : vector<32x32xf32> to vector<32xf32>
    %187 = vector.shape_cast %186 : vector<32xf32> to vector<32x1xf32>
    %188 = vector.broadcast %187 : vector<32x1xf32> to vector<32x32xf32>
    %189 = arith.subf %185, %188 : vector<32x32xf32>
    %190 = math.exp %189 : vector<32x32xf32>
    %cst_67 = arith.constant dense<0.000000e+00> : vector<32xf32>
    %191 = vector.multi_reduction <add>, %190, %cst_67 [1] : vector<32x32xf32> to vector<32xf32>
    %192 = vector.shape_cast %191 : vector<32xf32> to vector<32x1xf32>
    %193 = arith.truncf %190 : vector<32x32xf32> to vector<32x32xbf16>
    %194 = vector.extract_strided_slice %147 {offsets = [0, 16], sizes = [32, 16], strides = [1, 1]} : vector<32x64xbf16> to vector<32x16xbf16>
    %cst_68 = arith.constant dense<0.000000e+00> : vector<32x16xf32>
    %195 = tpu.matmul %193, %194, %cst_68 {dimension_numbers = #tpu.dot_dimension_numbers<[1], [0], [0], [1], [0, 0, 1, 1], [], []>} : vector<32x32xbf16>, vector<32x16xbf16>, vector<32x16xf32> -> vector<32x16xf32>
    %196 = tpu.reciprocal %192 {approx = true} : vector<32x1xf32> -> vector<32x1xf32>
    %197 = vector.broadcast %196 : vector<32x1xf32> to vector<32x16xf32>
    %198 = arith.mulf %195, %197 : vector<32x16xf32>
    %199 = vector.extract_strided_slice %149 {offsets = [0, 2], sizes = [32, 1], strides = [1, 1]} : vector<32x4xf32> to vector<32x1xf32>
    %200 = vector.extract_strided_slice %150 {offsets = [2, 0], sizes = [1, 32], strides = [1, 1]} : vector<4x32xf32> to vector<1x32xf32>
    %201 = vector.broadcast %199 : vector<32x1xf32> to vector<32x32xf32>
    %202 = vector.broadcast %200 : vector<1x32xf32> to vector<32x32xf32>
    %203 = arith.addf %201, %202 : vector<32x32xf32>
    %cst_69 = arith.constant 0.000000e+00 : f32
    %204 = vector.broadcast %cst_69 : f32 to vector<32x32xf32>
    %205 = arith.cmpf ogt, %203, %204 : vector<32x32xf32>
    %cst_70 = arith.constant 2.000000e-01 : f32
    %206 = vector.broadcast %cst_70 : f32 to vector<32x32xf32>
    %207 = arith.mulf %206, %203 : vector<32x32xf32>
    %208 = arith.select %205, %203, %207 : vector<32x32xi1>, vector<32x32xf32>
    %209 = arith.addf %208, %0 : vector<32x32xf32>
    %cst_71 = arith.constant dense<0xFF800000> : vector<32xf32>
    %210 = vector.multi_reduction <maximumf>, %209, %cst_71 [1] : vector<32x32xf32> to vector<32xf32>
    %211 = vector.shape_cast %210 : vector<32xf32> to vector<32x1xf32>
    %212 = vector.broadcast %211 : vector<32x1xf32> to vector<32x32xf32>
    %213 = arith.subf %209, %212 : vector<32x32xf32>
    %214 = math.exp %213 : vector<32x32xf32>
    %cst_72 = arith.constant dense<0.000000e+00> : vector<32xf32>
    %215 = vector.multi_reduction <add>, %214, %cst_72 [1] : vector<32x32xf32> to vector<32xf32>
    %216 = vector.shape_cast %215 : vector<32xf32> to vector<32x1xf32>
    %217 = arith.truncf %214 : vector<32x32xf32> to vector<32x32xbf16>
    %218 = vector.extract_strided_slice %147 {offsets = [0, 32], sizes = [32, 16], strides = [1, 1]} : vector<32x64xbf16> to vector<32x16xbf16>
    %cst_73 = arith.constant dense<0.000000e+00> : vector<32x16xf32>
    %219 = tpu.matmul %217, %218, %cst_73 {dimension_numbers = #tpu.dot_dimension_numbers<[1], [0], [0], [1], [0, 0, 1, 1], [], []>} : vector<32x32xbf16>, vector<32x16xbf16>, vector<32x16xf32> -> vector<32x16xf32>
    %220 = tpu.reciprocal %216 {approx = true} : vector<32x1xf32> -> vector<32x1xf32>
    %221 = vector.broadcast %220 : vector<32x1xf32> to vector<32x16xf32>
    %222 = arith.mulf %219, %221 : vector<32x16xf32>
    %223 = vector.extract_strided_slice %149 {offsets = [0, 3], sizes = [32, 1], strides = [1, 1]} : vector<32x4xf32> to vector<32x1xf32>
    %224 = vector.extract_strided_slice %150 {offsets = [3, 0], sizes = [1, 32], strides = [1, 1]} : vector<4x32xf32> to vector<1x32xf32>
    %225 = vector.broadcast %223 : vector<32x1xf32> to vector<32x32xf32>
    %226 = vector.broadcast %224 : vector<1x32xf32> to vector<32x32xf32>
    %227 = arith.addf %225, %226 : vector<32x32xf32>
    %cst_74 = arith.constant 0.000000e+00 : f32
    %228 = vector.broadcast %cst_74 : f32 to vector<32x32xf32>
    %229 = arith.cmpf ogt, %227, %228 : vector<32x32xf32>
    %cst_75 = arith.constant 2.000000e-01 : f32
    %230 = vector.broadcast %cst_75 : f32 to vector<32x32xf32>
    %231 = arith.mulf %230, %227 : vector<32x32xf32>
    %232 = arith.select %229, %227, %231 : vector<32x32xi1>, vector<32x32xf32>
    %233 = arith.addf %232, %0 : vector<32x32xf32>
    %cst_76 = arith.constant dense<0xFF800000> : vector<32xf32>
    %234 = vector.multi_reduction <maximumf>, %233, %cst_76 [1] : vector<32x32xf32> to vector<32xf32>
    %235 = vector.shape_cast %234 : vector<32xf32> to vector<32x1xf32>
    %236 = vector.broadcast %235 : vector<32x1xf32> to vector<32x32xf32>
    %237 = arith.subf %233, %236 : vector<32x32xf32>
    %238 = math.exp %237 : vector<32x32xf32>
    %cst_77 = arith.constant dense<0.000000e+00> : vector<32xf32>
    %239 = vector.multi_reduction <add>, %238, %cst_77 [1] : vector<32x32xf32> to vector<32xf32>
    %240 = vector.shape_cast %239 : vector<32xf32> to vector<32x1xf32>
    %241 = arith.truncf %238 : vector<32x32xf32> to vector<32x32xbf16>
    %242 = vector.extract_strided_slice %147 {offsets = [0, 48], sizes = [32, 16], strides = [1, 1]} : vector<32x64xbf16> to vector<32x16xbf16>
    %cst_78 = arith.constant dense<0.000000e+00> : vector<32x16xf32>
    %243 = tpu.matmul %241, %242, %cst_78 {dimension_numbers = #tpu.dot_dimension_numbers<[1], [0], [0], [1], [0, 0, 1, 1], [], []>} : vector<32x32xbf16>, vector<32x16xbf16>, vector<32x16xf32> -> vector<32x16xf32>
    %244 = tpu.reciprocal %240 {approx = true} : vector<32x1xf32> -> vector<32x1xf32>
    %245 = vector.broadcast %244 : vector<32x1xf32> to vector<32x16xf32>
    %246 = arith.mulf %243, %245 : vector<32x16xf32>
    %247 = tpu.concatenate %174, %198, %222, %246 in 1 : vector<32x16xf32>, vector<32x16xf32>, vector<32x16xf32>, vector<32x16xf32> -> vector<32x64xf32>
    %248 = arith.addf %247, %148 : vector<32x64xf32>
    %249 = arith.addf %248, %12 : vector<32x64xf32>
    %cst_79 = arith.constant 0.000000e+00 : f32
    %250 = vector.broadcast %cst_79 : f32 to vector<32x64xf32>
    %251 = arith.cmpf ogt, %249, %250 : vector<32x64xf32>
    %252 = math.exp %249 : vector<32x64xf32>
    %cst_80 = arith.constant 1.000000e+00 : f32
    %253 = vector.broadcast %cst_80 : f32 to vector<32x64xf32>
    %254 = arith.subf %252, %253 : vector<32x64xf32>
    %255 = arith.select %251, %249, %254 : vector<32x64xi1>, vector<32x64xf32>
    %256 = arith.truncf %255 : vector<32x64xf32> to vector<32x64xbf16>
    %cst_81 = arith.constant dense<0.000000e+00> : vector<32x16xf32>
    %257 = tpu.matmul %256, %6, %cst_81 {dimension_numbers = #tpu.dot_dimension_numbers<[1], [0], [0], [1], [0, 0, 1, 1], [], []>} : vector<32x64xbf16>, vector<64x16xbf16>, vector<32x16xf32> -> vector<32x16xf32>
    %cst_82 = arith.constant 1.000000e+00 : f32
    %258 = vector.broadcast %cst_82 : f32 to vector<32x16xf32>
    %259 = arith.mulf %258, %141 : vector<32x16xf32>
    %260 = arith.subf %257, %259 : vector<32x16xf32>
    %cst_83 = arith.constant 1.000000e+00 : f32
    %261 = vector.broadcast %cst_83 : f32 to vector<32x16xf32>
    %262 = arith.mulf %261, %144 : vector<32x16xf32>
    %263 = arith.subf %260, %262 : vector<32x16xf32>
    %cst_84 = arith.constant 1.000000e+00 : f32
    %264 = vector.broadcast %cst_84 : f32 to vector<32x16xf32>
    %265 = arith.mulf %264, %263 : vector<32x16xf32>
    %266 = arith.addf %141, %265 : vector<32x16xf32>
    %cst_85 = arith.constant 1.000000e+00 : f32
    %267 = vector.broadcast %cst_85 : f32 to vector<32x16xf32>
    %268 = arith.mulf %267, %266 : vector<32x16xf32>
    %269 = arith.addf %144, %268 : vector<32x16xf32>
    %270 = arith.truncf %269 : vector<32x16xf32> to vector<32x16xbf16>
    %cst_86 = arith.constant dense<0.000000e+00> : vector<32x128xf32>
    %271 = tpu.matmul %270, %7, %cst_86 {dimension_numbers = #tpu.dot_dimension_numbers<[1], [0], [0], [1], [0, 0, 1, 1], [], []>} : vector<32x16xbf16>, vector<16x128xbf16>, vector<32x128xf32> -> vector<32x128xf32>
    %272 = vector.broadcast %9 : vector<1x128xf32> to vector<32x128xf32>
    %273 = arith.addf %271, %272 : vector<32x128xf32>
    %c0_87 = arith.constant 0 : index
    %c0_88 = arith.constant 0 : index
    %274 = vector.load %arg12[%c0_87, %c0_88] : memref<32x128xf32, #tpu.memory_space<vmem>>, vector<32x128xf32>
    tpu.vector_store %arg12[%c0_87, %c0_88], %273 {strides = array<i32>} : memref<32x128xf32, #tpu.memory_space<vmem>>, vector<32x128xf32>,
    return
  }
}

</mosaic_0001>

<llo_original>
// kernel: _lambda_.1
$region0: #{_lambda_.1}
  #allocation0 [shape = 'u32[]', space=smem, size = 0x4, offset = 0x4, fixed_abs, tag = 'smem constant byte address 0x4 - core index']
  #allocation1 [shape = 'u32[144,128]{1,0:T(1,128)}', space=vmem, size = 0x12000, scoped, tag = 'internal scratch']
  %s0 = inlined_call_operand.vmem [shape: f32[32,16], index: 0, kind: input, shape index: {}]
  %s1 = inlined_call_operand.vmem [shape: f32[32,32], index: 1, kind: input, shape index: {}]
  %s2 = inlined_call_operand.vmem [shape: bf16[16,16], index: 2, kind: input, shape index: {}]
  %s3 = inlined_call_operand.vmem [shape: f32[1,16], index: 3, kind: input, shape index: {}]
  %s4 = inlined_call_operand.vmem [shape: bf16[16,64], index: 4, kind: input, shape index: {}]
  %s5 = inlined_call_operand.vmem [shape: bf16[16,64], index: 5, kind: input, shape index: {}]
  %s6 = inlined_call_operand.vmem [shape: f32[1,64], index: 6, kind: input, shape index: {}]
  %s7 = inlined_call_operand.vmem [shape: bf16[4,64], index: 7, kind: input, shape index: {}]
  %s8 = inlined_call_operand.vmem [shape: bf16[64,4], index: 8, kind: input, shape index: {}]
  %s9 = inlined_call_operand.vmem [shape: bf16[64,16], index: 9, kind: input, shape index: {}]
  %s10 = inlined_call_operand.vmem [shape: bf16[16,128], index: 10, kind: input, shape index: {}]
  %s11 = inlined_call_operand.vmem [shape: f32[1,128], index: 11, kind: input, shape index: {}]
  %s12 = inlined_call_operand.vmem [shape: f32[32,128], index: 12, kind: output, shape index: {}]
  %s13 = sld [smem:[#allocation0]]
  $region58: #{_lambda_.1} parent=0
    _
  %s15 = ssub.s32 1, %s13
  %s16 = scalar_select 0, %s15, %s13
  // Predicated region
  $region2: #{_lambda_.1} parent=0 // pred_check
    _
  $region3: #{_lambda_.1} parent=0 // pred_check_branch
    %18 = sbr.rel (0) target = $region5
  $region4: #{_lambda_.1} parent=0 // pred_region
    _
  $region5: #{_lambda_.1} parent=0 // pred_fallthru
    _
  // Predicated region
  $region6: #{_lambda_.1} parent=0 // pred_check
    _
  $region7: #{_lambda_.1} parent=0 // pred_check_branch
    %20 = sbr.rel (0) target = $region9
  $region8: #{_lambda_.1} parent=0 // pred_region
    _
  $region9: #{_lambda_.1} parent=0 // pred_fallthru
    _
  // Predicated region
  $region10: #{_lambda_.1} parent=0 // pred_check
    _
  $region11: #{_lambda_.1} parent=0 // pred_check_branch
    %22 = sbr.rel (0) target = $region13
  $region12: #{_lambda_.1} parent=0 // pred_region
    _
  $region13: #{_lambda_.1} parent=0 // pred_fallthru
    _
  // Predicated region
  $region14: #{_lambda_.1} parent=0 // pred_check
    _
  $region15: #{_lambda_.1} parent=0 // pred_check_branch
    %24 = sbr.rel (0) target = $region17
  $region16: #{_lambda_.1} parent=0 // pred_region
    _
  $region17: #{_lambda_.1} parent=0 // pred_fallthru
    _
  // Predicated region
  $region18: #{_lambda_.1} parent=0 // pred_check
    _
  $region19: #{_lambda_.1} parent=0 // pred_check_branch
    %26 = sbr.rel (0) target = $region21
  $region20: #{_lambda_.1} parent=0 // pred_region
    _
  $region21: #{_lambda_.1} parent=0 // pred_fallthru
    _
  // Predicated region
  $region22: #{_lambda_.1} parent=0 // pred_check
    _
  $region23: #{_lambda_.1} parent=0 // pred_check_branch
    %28 = sbr.rel (0) target = $region25
  $region24: #{_lambda_.1} parent=0 // pred_region
    _
  $region25: #{_lambda_.1} parent=0 // pred_fallthru
    _
  // Predicated region
  $region26: #{_lambda_.1} parent=0 // pred_check
    _
  $region27: #{_lambda_.1} parent=0 // pred_check_branch
    %30 = sbr.rel (0) target = $region29
  $region28: #{_lambda_.1} parent=0 // pred_region
    _
  $region29: #{_lambda_.1} parent=0 // pred_fallthru
    _
  // Predicated region
  $region30: #{_lambda_.1} parent=0 // pred_check
    _
  $region31: #{_lambda_.1} parent=0 // pred_check_branch
    %32 = sbr.rel (0) target = $region33
  $region32: #{_lambda_.1} parent=0 // pred_region
    _
  $region33: #{_lambda_.1} parent=0 // pred_fallthru
    _
  // Predicated region
  $region34: #{_lambda_.1} parent=0 // pred_check
    _
  $region35: #{_lambda_.1} parent=0 // pred_check_branch
    %34 = sbr.rel (0) target = $region37
  $region36: #{_lambda_.1} parent=0 // pred_region
    _
  $region37: #{_lambda_.1} parent=0 // pred_fallthru
    _
  // Predicated region
  $region38: #{_lambda_.1} parent=0 // pred_check
    _
  $region39: #{_lambda_.1} parent=0 // pred_check_branch
    %36 = sbr.rel (0) target = $region41
  $region40: #{_lambda_.1} parent=0 // pred_region
    _
  $region41: #{_lambda_.1} parent=0 // pred_fallthru
    _
  // Predicated region
  $region42: #{_lambda_.1} parent=0 // pred_check
    _
  $region43: #{_lambda_.1} parent=0 // pred_check_branch
    %38 = sbr.rel (0) target = $region45
  $region44: #{_lambda_.1} parent=0 // pred_region
    _
  $region45: #{_lambda_.1} parent=0 // pred_fallthru
    _
  // Predicated region
  $region46: #{_lambda_.1} parent=0 // pred_check
    _
  $region47: #{_lambda_.1} parent=0 // pred_check_branch
    %40 = sbr.rel (0) target = $region49
  $region48: #{_lambda_.1} parent=0 // pred_region
    _
  $region49: #{_lambda_.1} parent=0 // pred_fallthru
    _
  %v42 = vld [vmem:[%s1] sm:$0xff]
  %v43 = vld [vmem:[%s1 + $0x8] sm:$0xff]
  %v44 = vld [vmem:[%s1 + $0x10] sm:$0xff]
  %v45 = vld [vmem:[%s1 + $0x18] sm:$0xff]
  %v46 = vld [vmem:[%s2] sm:$0xf]
  %v47 = vld [vmem:[%s2 + $0x4] sm:$0xf]
  %v48 = vld [vmem:[%s4] sm:$0xf]
  %v49 = vld [vmem:[%s4 + $0x4] sm:$0xf]
  %v50 = vld [vmem:[%s5] sm:$0xf]
  %v51 = vld [vmem:[%s5 + $0x4] sm:$0xf]
  %v52 = vld [vmem:[%s7] sm:$0x3]
  %v53 = vld [vmem:[%s8] sm:$0xf]
  %v54 = vld [vmem:[%s8 + $0x4] sm:$0xf]
  %v55 = vld [vmem:[%s8 + $0x8] sm:$0xf]
  %v56 = vld [vmem:[%s8 + $0xc] sm:$0xf]
  %v57 = vld [vmem:[%s8 + $0x10] sm:$0xf]
  %v58 = vld [vmem:[%s8 + $0x14] sm:$0xf]
  %v59 = vld [vmem:[%s8 + $0x18] sm:$0xf]
  %v60 = vld [vmem:[%s8 + $0x1c] sm:$0xf]
  %v61 = vld [vmem:[%s9] sm:$0xf]
  %v62 = vld [vmem:[%s9 + $0x4] sm:$0xf]
  %v63 = vld [vmem:[%s9 + $0x8] sm:$0xf]
  %v64 = vld [vmem:[%s9 + $0xc] sm:$0xf]
  %v65 = vld [vmem:[%s9 + $0x10] sm:$0xf]
  %v66 = vld [vmem:[%s9 + $0x14] sm:$0xf]
  %v67 = vld [vmem:[%s9 + $0x18] sm:$0xf]
  %v68 = vld [vmem:[%s9 + $0x1c] sm:$0xf]
  %v69 = vld [vmem:[%s10] sm:$0xf]
  %v70 = vld [vmem:[%s10 + $0x4] sm:$0xf]
  %v71 = vld [vmem:[%s3] sm:$0x1]
  %v72 = vld [vmem:[%s11] sm:$0x1]
  %v73 = vld [vmem:[%s6] sm:$0x1]
  %v75 = vlaneseq
  %v76 = vshrl.u32 %v75, 7
  %v77 = vsub.s32 0, %v76
  %v78 = vrot.slane %v73, %v77
  %v80 = vld [vmem:[%s0] sm:$0xff]
  %v81 = vld [vmem:[%s0 + $0x8] sm:$0xff]
  %v82 = vld [vmem:[%s0 + $0x10] sm:$0xff]
  %v83 = vld [vmem:[%s0 + $0x18] sm:$0xff]
  %v84 = vpack.c.bf16 %v81, %v80
  %v85 = vpack.c.bf16 %v83, %v82
  %v87 = vlaneseq
  %v88 = vshrl.u32 %v87, 7
  %v89 = vsub.s32 0, %v88
  %v90 = vrot.slane %v71, %v89
  %v94 = vunpack.c.l.b16 %v46
  %v95 = vunpack.c.l.b16 %v47
  %v96 = vpack.c.b16 %v95, %v94
  %vm98 = vcmask 130048
  %v100 = vsel %vm98, %v84, 0
  %v103 = vsel %vm98, %v85, 0
  %105 = vmatprep.subr.bf16.mxu0 0
  %106 = vmatpush1.bf16.msra.mxu0 0
  %107 = vmatprep.subr.bf16.mxu0 0
  %108 = vmatpush1.bf16.msra.mxu0 0
  %109 = vmatprep.subr.bf16.mxu0 0
  %110 = vmatpush1.bf16.msra.mxu0 0
  %111 = vmatprep.subr.bf16.mxu0 0
  %112 = vmatpush1.bf16.msra.mxu0 0
  %113 = vmatprep.subr.bf16.mxu0 0
  %114 = vmatpush1.bf16.msra.mxu0 0
  %115 = vmatprep.subr.bf16.mxu0 0
  %116 = vmatpush1.bf16.msra.mxu0 0
  %117 = vmatprep.subr.bf16.mxu0 0
  %118 = vmatpush1.bf16.msra.mxu0 0
  %119 = vmatprep.subr.bf16.mxu0 0
  %120 = vmatpush1.bf16.msra.mxu0 %v96
  %121 = vmatprep.subr.bf16.mxu0 0
  %122 = vmatpush2.bf16.msra.mxu0 0
  %123 = vmatprep.subr.bf16.mxu0 0
  %124 = vmatpush2.bf16.msra.mxu0 0
  %125 = vmatprep.subr.bf16.mxu0 0
  %126 = vmatpush2.bf16.msra.mxu0 0
  %127 = vmatprep.subr.bf16.mxu0 0
  %128 = vmatpush2.bf16.msra.mxu0 0
  %129 = vmatprep.subr.bf16.mxu0 0
  %130 = vmatpush2.bf16.msra.mxu0 0
  %131 = vmatprep.subr.bf16.mxu0 0
  %132 = vmatpush2.bf16.msra.mxu0 0
  %133 = vmatprep.subr.bf16.mxu0 0
  %134 = vmatpush2.bf16.msra.mxu0 0
  %135 = vmatprep.subr.bf16.mxu0 0
  %136 = vmatpush2.bf16.msra.mxu0 0
  %137 = vmatprep.mubr.bf16.mxu0 0
  %138 = vmatmul.mubr.bf16.gmra.mxu0 %v100
  %v139 = vpop.f32.mrf.mxu0
  %v140 = vadd.f32 %v90, %v139
  %v141 = vpop.f32.mrf.mxu0
  %v142 = vpop.f32.mrf.mxu0
  %v143 = vadd.f32 %v90, %v142
  %v144 = vpop.f32.mrf.mxu0
  %145 = vmatprep.mubr.bf16.mxu0 0
  %146 = vmatmul.mubr.bf16.gmra.mxu0 %v103
  %v147 = vpop.f32.mrf.mxu0
  %v148 = vadd.f32 %v90, %v147
  %v149 = vpop.f32.mrf.mxu0
  %v150 = vpop.f32.mrf.mxu0
  %v151 = vadd.f32 %v90, %v150
  %v152 = vpop.f32.mrf.mxu0
  %153 = vdwg.mxu0
  %v154 = vmax.f32 %v140, 0.0
  %v155 = vmax.f32 %v143, 0.0
  %v156 = vmax.f32 %v148, 0.0
  %v157 = vmax.f32 %v151, 0.0
  %v158 = vpack.c.bf16 %v155, %v154
  %v159 = vpack.c.bf16 %v157, %v156
  %v162 = vunpack.c.l.b16 %v48
  %v163 = vunpack.c.l.b16 %v49
  %v164 = vpack.c.b16 %v163, %v162
  %v167 = vsel %vm98, %v158, 0
  %v170 = vsel %vm98, %v159, 0
  %172 = vmatprep.subr.bf16.mxu0 0
  %173 = vmatpush1.bf16.msra.mxu0 0
  %174 = vmatprep.subr.bf16.mxu0 0
  %175 = vmatpush1.bf16.msra.mxu0 0
  %176 = vmatprep.subr.bf16.mxu0 0
  %177 = vmatpush1.bf16.msra.mxu0 0
  %178 = vmatprep.subr.bf16.mxu0 0
  %179 = vmatpush1.bf16.msra.mxu0 0
  %180 = vmatprep.subr.bf16.mxu0 0
  %181 = vmatpush1.bf16.msra.mxu0 0
  %182 = vmatprep.subr.bf16.mxu0 0
  %183 = vmatpush1.bf16.msra.mxu0 0
  %184 = vmatprep.subr.bf16.mxu0 0
  %185 = vmatpush1.bf16.msra.mxu0 0
  %186 = vmatprep.subr.bf16.mxu0 0
  %187 = vmatpush1.bf16.msra.mxu0 %v164
  %188 = vmatprep.subr.bf16.mxu0 0
  %189 = vmatpush2.bf16.msra.mxu0 0
  %190 = vmatprep.subr.bf16.mxu0 0
  %191 = vmatpush2.bf16.msra.mxu0 0
  %192 = vmatprep.subr.bf16.mxu0 0
  %193 = vmatpush2.bf16.msra.mxu0 0
  %194 = vmatprep.subr.bf16.mxu0 0
  %195 = vmatpush2.bf16.msra.mxu0 0
  %196 = vmatprep.subr.bf16.mxu0 0
  %197 = vmatpush2.bf16.msra.mxu0 0
  %198 = vmatprep.subr.bf16.mxu0 0
  %199 = vmatpush2.bf16.msra.mxu0 0
  %200 = vmatprep.subr.bf16.mxu0 0
  %201 = vmatpush2.bf16.msra.mxu0 0
  %202 = vmatprep.subr.bf16.mxu0 0
  %203 = vmatpush2.bf16.msra.mxu0 0
  %204 = vmatprep.mubr.bf16.mxu0 0
  %205 = vmatmul.mubr.bf16.gmra.mxu0 %v167
  %v206 = vpop.f32.mrf.mxu0
  %v207 = vadd.f32 0.0, %v206
  %v208 = vpop.f32.mrf.mxu0
  %v209 = vpop.f32.mrf.mxu0
  %v210 = vadd.f32 0.0, %v209
  %v211 = vpop.f32.mrf.mxu0
  %212 = vmatprep.mubr.bf16.mxu0 0
  %213 = vmatmul.mubr.bf16.gmra.mxu0 %v170
  %v214 = vpop.f32.mrf.mxu0
  %v215 = vadd.f32 0.0, %v214
  %v216 = vpop.f32.mrf.mxu0
  %v217 = vpop.f32.mrf.mxu0
  %v218 = vadd.f32 0.0, %v217
  %v219 = vpop.f32.mrf.mxu0
  %220 = vdwg.mxu0
  %v221 = vpack.c.bf16 %v210, %v207
  %v222 = vpack.c.bf16 %v218, %v215
  %v225 = vunpack.c.l.b16 %v50
  %v226 = vunpack.c.l.b16 %v51
  %v227 = vpack.c.b16 %v226, %v225
  %229 = vmatprep.subr.bf16.mxu0 0
  %230 = vmatpush1.bf16.msra.mxu0 0
  %231 = vmatprep.subr.bf16.mxu0 0
  %232 = vmatpush1.bf16.msra.mxu0 0
  %233 = vmatprep.subr.bf16.mxu0 0
  %234 = vmatpush1.bf16.msra.mxu0 0
  %235 = vmatprep.subr.bf16.mxu0 0
  %236 = vmatpush1.bf16.msra.mxu0 0
  %237 = vmatprep.subr.bf16.mxu0 0
  %238 = vmatpush1.bf16.msra.mxu0 0
  %239 = vmatprep.subr.bf16.mxu0 0
  %240 = vmatpush1.bf16.msra.mxu0 0
  %241 = vmatprep.subr.bf16.mxu0 0
  %242 = vmatpush1.bf16.msra.mxu0 0
  %243 = vmatprep.subr.bf16.mxu0 0
  %244 = vmatpush1.bf16.msra.mxu0 %v227
  %245 = vmatprep.subr.bf16.mxu0 0
  %246 = vmatpush2.bf16.msra.mxu0 0
  %247 = vmatprep.subr.bf16.mxu0 0
  %248 = vmatpush2.bf16.msra.mxu0 0
  %249 = vmatprep.subr.bf16.mxu0 0
  %250 = vmatpush2.bf16.msra.mxu0 0
  %251 = vmatprep.subr.bf16.mxu0 0
  %252 = vmatpush2.bf16.msra.mxu0 0
  %253 = vmatprep.subr.bf16.mxu0 0
  %254 = vmatpush2.bf16.msra.mxu0 0
  %255 = vmatprep.subr.bf16.mxu0 0
  %256 = vmatpush2.bf16.msra.mxu0 0
  %257 = vmatprep.subr.bf16.mxu0 0
  %258 = vmatpush2.bf16.msra.mxu0 0
  %259 = vmatprep.subr.bf16.mxu0 0
  %260 = vmatpush2.bf16.msra.mxu0 0
  %261 = vmatprep.mubr.bf16.mxu0 0
  %262 = vmatmul.mubr.bf16.gmra.mxu0 %v167
  %v263 = vpop.f32.mrf.mxu0
  %v264 = vadd.f32 0.0, %v263
  %v265 = vpop.f32.mrf.mxu0
  %v266 = vpop.f32.mrf.mxu0
  %v267 = vadd.f32 0.0, %v266
  %v268 = vpop.f32.mrf.mxu0
  %269 = vmatprep.mubr.bf16.mxu0 0
  %270 = vmatmul.mubr.bf16.gmra.mxu0 %v170
  %v271 = vpop.f32.mrf.mxu0
  %v272 = vadd.f32 0.0, %v271
  %v273 = vpop.f32.mrf.mxu0
  %v274 = vpop.f32.mrf.mxu0
  %v275 = vadd.f32 0.0, %v274
  %v276 = vpop.f32.mrf.mxu0
  %277 = vdwg.mxu0
  %v286 = vunpack.c.l.b16 %v53
  %v287 = vunpack.c.l.b16 %v54
  %v288 = vunpack.c.l.b16 %v55
  %v289 = vunpack.c.l.b16 %v56
  %v290 = vunpack.c.l.b16 %v57
  %v291 = vunpack.c.l.b16 %v58
  %v292 = vunpack.c.l.b16 %v59
  %v293 = vunpack.c.l.b16 %v60
  %v294 = vpack.c.b16 %v287, %v286
  %v295 = vpack.c.b16 %v289, %v288
  %v296 = vpack.c.b16 %v291, %v290
  %v297 = vpack.c.b16 %v293, %v292
  %vm302 = vcmask 523264
  %v304 = vsel %vm302, %v221, 0
  %v307 = vsel %vm302, %v222, 0
  %309 = vmatprep.subr.bf16.mxu0 0
  %310 = vmatpush1.bf16.msra.mxu0 0
  %311 = vmatprep.subr.bf16.mxu0 0
  %312 = vmatpush1.bf16.msra.mxu0 0
  %313 = vmatprep.subr.bf16.mxu0 0
  %314 = vmatpush1.bf16.msra.mxu0 0
  %315 = vmatprep.subr.bf16.mxu0 0
  %316 = vmatpush1.bf16.msra.mxu0 0
  %317 = vmatprep.subr.bf16.mxu0 0
  %318 = vmatpush1.bf16.msra.mxu0 %v297
  %319 = vmatprep.subr.bf16.mxu0 0
  %320 = vmatpush1.bf16.msra.mxu0 %v296
  %321 = vmatprep.subr.bf16.mxu0 0
  %322 = vmatpush1.bf16.msra.mxu0 %v295
  %323 = vmatprep.subr.bf16.mxu0 0
  %324 = vmatpush1.bf16.msra.mxu0 %v294
  %325 = vmatprep.subr.bf16.mxu0 0
  %326 = vmatpush2.bf16.msra.mxu0 0
  %327 = vmatprep.subr.bf16.mxu0 0
  %328 = vmatpush2.bf16.msra.mxu0 0
  %329 = vmatprep.subr.bf16.mxu0 0
  %330 = vmatpush2.bf16.msra.mxu0 0
  %331 = vmatprep.subr.bf16.mxu0 0
  %332 = vmatpush2.bf16.msra.mxu0 0
  %333 = vmatprep.subr.bf16.mxu0 0
  %334 = vmatpush2.bf16.msra.mxu0 0
  %335 = vmatprep.subr.bf16.mxu0 0
  %336 = vmatpush2.bf16.msra.mxu0 0
  %337 = vmatprep.subr.bf16.mxu0 0
  %338 = vmatpush2.bf16.msra.mxu0 0
  %339 = vmatprep.subr.bf16.mxu0 0
  %340 = vmatpush2.bf16.msra.mxu0 0
  %341 = vmatprep.mubr.bf16.mxu0 0
  %342 = vmatmul.mubr.bf16.gmra.mxu0 %v304
  %v343 = vpop.f32.mrf.mxu0
  %v344 = vadd.f32 0.0, %v343
  %v345 = vpop.f32.mrf.mxu0
  %v346 = vpop.f32.mrf.mxu0
  %v347 = vadd.f32 0.0, %v346
  %v348 = vpop.f32.mrf.mxu0
  %349 = vmatprep.mubr.bf16.mxu0 0
  %350 = vmatmul.mubr.bf16.gmra.mxu0 %v307
  %v351 = vpop.f32.mrf.mxu0
  %v352 = vadd.f32 0.0, %v351
  %v353 = vpop.f32.mrf.mxu0
  %v354 = vpop.f32.mrf.mxu0
  %v355 = vadd.f32 0.0, %v354
  %v356 = vpop.f32.mrf.mxu0
  %357 = vdwg.mxu0
  %v359 = vsel %vm302, %v52, 0
  %361 = vmatprep.subr.bf16.mxu0 0
  %362 = vmatpush1.bf16.xpose.msra.mxu0 0
  %363 = vmatprep.subr.bf16.mxu0 0
  %364 = vmatpush1.bf16.xpose.msra.mxu0 0
  %365 = vmatprep.subr.bf16.mxu0 0
  %366 = vmatpush1.bf16.xpose.msra.mxu0 0
  %367 = vmatprep.subr.bf16.mxu0 0
  %368 = vmatpush1.bf16.xpose.msra.mxu0 0
  %369 = vmatprep.subr.bf16.mxu0 0
  %370 = vmatpush1.bf16.xpose.msra.mxu0 0
  %371 = vmatprep.subr.bf16.mxu0 0
  %372 = vmatpush1.bf16.xpose.msra.mxu0 0
  %373 = vmatprep.subr.bf16.mxu0 0
  %374 = vmatpush1.bf16.xpose.msra.mxu0 %v307
  %375 = vmatprep.subr.bf16.mxu0 0
  %376 = vmatpush1.bf16.xpose.msra.mxu0 %v304
  %377 = vmatprep.subr.bf16.mxu0 0
  %378 = vmatpush2.bf16.xpose.msra.mxu0 0
  %379 = vmatprep.subr.bf16.mxu0 0
  %380 = vmatpush2.bf16.xpose.msra.mxu0 0
  %381 = vmatprep.subr.bf16.mxu0 0
  %382 = vmatpush2.bf16.xpose.msra.mxu0 0
  %383 = vmatprep.subr.bf16.mxu0 0
  %384 = vmatpush2.bf16.xpose.msra.mxu0 0
  %385 = vmatprep.subr.bf16.mxu0 0
  %386 = vmatpush2.bf16.xpose.msra.mxu0 0
  %387 = vmatprep.subr.bf16.mxu0 0
  %388 = vmatpush2.bf16.xpose.msra.mxu0 0
  %389 = vmatprep.subr.bf16.mxu0 0
  %390 = vmatpush2.bf16.xpose.msra.mxu0 0
  %391 = vmatprep.subr.bf16.mxu0 0
  %392 = vmatpush2.bf16.xpose.msra.mxu0 0
  %393 = vmatprep.mubr.bf16.mxu0 0
  %394 = vmatmul.mubr.bf16.gmra.mxu0 %v359
  %v395 = vpop.f32.mrf.mxu0
  %v396 = vadd.f32 0.0, %v395
  %v397 = vpop.f32.mrf.mxu0
  %v398 = vpop.f32.mrf.mxu0
  %v399 = vpop.f32.mrf.mxu0
  %400 = vdwg.mxu0
  %402 = vset.pattern.permute.xlu0 0
  %403 = vperm.xlu0 %402, %v344
  %v404 = vpop.permute.xlu0 %403
  %407 = vset.pattern.permute.xlu0 0
  %408 = vperm.xlu0 %407, %v347
  %v409 = vpop.permute.xlu0 %408
  %412 = vset.pattern.permute.xlu0 0
  %413 = vperm.xlu0 %412, %v352
  %v414 = vpop.permute.xlu0 %413
  %417 = vset.pattern.permute.xlu0 0
  %418 = vperm.xlu0 %417, %v355
  %v419 = vpop.permute.xlu0 %418
  %v421 = vlaneseq
  %v422 = vshrl.u32 %v421, 7
  %v423 = vsub.s32 0, %v422
  %v424 = vrot.slane %v396, %v423
  %v425 = vadd.f32 %v404, %v424
  %v426 = vadd.f32 %v409, %v424
  %v427 = vadd.f32 %v414, %v424
  %v428 = vadd.f32 %v419, %v424
  %vm429 = vcmp.gt.f32.partialorder %v425, 0.0
  %vm430 = vcmp.gt.f32.partialorder %v426, 0.0
  %vm431 = vcmp.gt.f32.partialorder %v427, 0.0
  %vm432 = vcmp.gt.f32.partialorder %v428, 0.0
  %v433 = vmul.f32 %v425, 0.2
  %v434 = vmul.f32 %v426, 0.2
  %v435 = vmul.f32 %v427, 0.2
  %v436 = vmul.f32 %v428, 0.2
  %v437 = vsel %vm429, %v425, %v433
  %v438 = vsel %vm430, %v426, %v434
  %v439 = vsel %vm431, %v427, %v435
  %v440 = vsel %vm432, %v428, %v436
  %v441 = vadd.f32 %v437, %v42
  %v442 = vadd.f32 %v438, %v43
  %v443 = vadd.f32 %v439, %v44
  %v444 = vadd.f32 %v440, %v45
  %vm445 = vcmask 261120
  %v446 = vsel %vm445, %v441, -inf
  %447 = vmax.xlane.f32.xlu0 %v446
  %v448 = vpop.xlane.xlu0 %447
  %v449 = vsel %vm445, %v442, -inf
  %450 = vmax.xlane.f32.xlu0 %v449
  %v451 = vpop.xlane.xlu0 %450
  %v452 = vsel %vm445, %v443, -inf
  %453 = vmax.xlane.f32.xlu0 %v452
  %v454 = vpop.xlane.xlu0 %453
  %v455 = vsel %vm445, %v444, -inf
  %456 = vmax.xlane.f32.xlu0 %v455
  %v457 = vpop.xlane.xlu0 %456
  %v458 = vsub.f32 %v441, %v448
  %v459 = vsub.f32 %v442, %v451
  %v460 = vsub.f32 %v443, %v454
  %v461 = vsub.f32 %v444, %v457
  %v462 = vmul.f32 %v458, 1.442695
  %v463 = vpow.pop %v462
  %v464 = vmul.f32 %v459, 1.442695
  %v465 = vpow.pop %v464
  %v466 = vmul.f32 %v460, 1.442695
  %v467 = vpow.pop %v466
  %v468 = vmul.f32 %v461, 1.442695
  %v469 = vpow.pop %v468
  %v470 = vsel %vm445, %v463, 0.0
  %471 = vadd.xlane.f32.xlu0 %v470
  %v472 = vpop.xlane.xlu0 %471
  %v473 = vsel %vm445, %v465, 0.0
  %474 = vadd.xlane.f32.xlu0 %v473
  %v475 = vpop.xlane.xlu0 %474
  %v476 = vsel %vm445, %v467, 0.0
  %477 = vadd.xlane.f32.xlu0 %v476
  %v478 = vpop.xlane.xlu0 %477
  %v479 = vsel %vm445, %v469, 0.0
  %480 = vadd.xlane.f32.xlu0 %v479
  %v481 = vpop.xlane.xlu0 %480
  %v482 = vpack.c.bf16 %v465, %v463
  %v483 = vpack.c.bf16 %v469, %v467
  %v485 = vsel %vm445, %v482, 0
  %v488 = vsel %vm445, %v483, 0
  %490 = vmatprep.subr.bf16.mxu0 0
  %491 = vmatpush1.bf16.msra.mxu0 0
  %492 = vmatprep.subr.bf16.mxu0 0
  %493 = vmatpush1.bf16.msra.mxu0 0
  %494 = vmatprep.subr.bf16.mxu0 0
  %495 = vmatpush1.bf16.msra.mxu0 0
  %496 = vmatprep.subr.bf16.mxu0 0
  %497 = vmatpush1.bf16.msra.mxu0 0
  %498 = vmatprep.subr.bf16.mxu0 0
  %499 = vmatpush1.bf16.msra.mxu0 0
  %500 = vmatprep.subr.bf16.mxu0 0
  %501 = vmatpush1.bf16.msra.mxu0 0
  %502 = vmatprep.subr.bf16.mxu0 0
  %503 = vmatpush1.bf16.msra.mxu0 %v222
  %504 = vmatprep.subr.bf16.mxu0 0
  %505 = vmatpush1.bf16.msra.mxu0 %v221
  %506 = vmatprep.subr.bf16.mxu0 0
  %507 = vmatpush2.bf16.msra.mxu0 0
  %508 = vmatprep.subr.bf16.mxu0 0
  %509 = vmatpush2.bf16.msra.mxu0 0
  %510 = vmatprep.subr.bf16.mxu0 0
  %511 = vmatpush2.bf16.msra.mxu0 0
  %512 = vmatprep.subr.bf16.mxu0 0
  %513 = vmatpush2.bf16.msra.mxu0 0
  %514 = vmatprep.subr.bf16.mxu0 0
  %515 = vmatpush2.bf16.msra.mxu0 0
  %516 = vmatprep.subr.bf16.mxu0 0
  %517 = vmatpush2.bf16.msra.mxu0 0
  %518 = vmatprep.subr.bf16.mxu0 0
  %519 = vmatpush2.bf16.msra.mxu0 0
  %520 = vmatprep.subr.bf16.mxu0 0
  %521 = vmatpush2.bf16.msra.mxu0 0
  %522 = vmatprep.mubr.bf16.mxu0 0
  %523 = vmatmul.mubr.bf16.gmra.mxu0 %v485
  %v524 = vpop.f32.mrf.mxu0
  %v525 = vadd.f32 0.0, %v524
  %v526 = vpop.f32.mrf.mxu0
  %v527 = vpop.f32.mrf.mxu0
  %v528 = vadd.f32 0.0, %v527
  %v529 = vpop.f32.mrf.mxu0
  %530 = vmatprep.mubr.bf16.mxu0 0
  %531 = vmatmul.mubr.bf16.gmra.mxu0 %v488
  %v532 = vpop.f32.mrf.mxu0
  %v533 = vadd.f32 0.0, %v532
  %v534 = vpop.f32.mrf.mxu0
  %v535 = vpop.f32.mrf.mxu0
  %v536 = vadd.f32 0.0, %v535
  %v537 = vpop.f32.mrf.mxu0
  %538 = vdwg.mxu0
  %v539 = vrcp.pop %v472
  %v540 = vrcp.pop %v475
  %v541 = vrcp.pop %v478
  %v542 = vrcp.pop %v481
  %v543 = vmul.f32 %v525, %v539
  %v544 = vmul.f32 %v528, %v540
  %v545 = vmul.f32 %v533, %v541
  %v546 = vmul.f32 %v536, %v542
  %547 = vset.pattern.permute.xlu0 1
  %548 = vperm.xlu0 %547, %v344
  %v549 = vpop.permute.xlu0 %548
  %551 = vset.pattern.permute.xlu0 1
  %552 = vperm.xlu0 %551, %v347
  %v553 = vpop.permute.xlu0 %552
  %555 = vset.pattern.permute.xlu0 1
  %556 = vperm.xlu0 %555, %v352
  %v557 = vpop.permute.xlu0 %556
  %559 = vset.pattern.permute.xlu0 1
  %560 = vperm.xlu0 %559, %v355
  %v561 = vpop.permute.xlu0 %560
  %v563 = vlaneseq
  %v564 = vshrl.u32 %v563, 7
  %v565 = vsub.s32 1, %v564
  %v566 = vrot.slane %v396, %v565
  %v567 = vadd.f32 %v549, %v566
  %v568 = vadd.f32 %v553, %v566
  %v569 = vadd.f32 %v557, %v566
  %v570 = vadd.f32 %v561, %v566
  %vm571 = vcmp.gt.f32.partialorder %v567, 0.0
  %vm572 = vcmp.gt.f32.partialorder %v568, 0.0
  %vm573 = vcmp.gt.f32.partialorder %v569, 0.0
  %vm574 = vcmp.gt.f32.partialorder %v570, 0.0
  %v575 = vmul.f32 %v567, 0.2
  %v576 = vmul.f32 %v568, 0.2
  %v577 = vmul.f32 %v569, 0.2
  %v578 = vmul.f32 %v570, 0.2
  %v579 = vsel %vm571, %v567, %v575
  %v580 = vsel %vm572, %v568, %v576
  %v581 = vsel %vm573, %v569, %v577
  %v582 = vsel %vm574, %v570, %v578
  %v583 = vadd.f32 %v579, %v42
  %v584 = vadd.f32 %v580, %v43
  %v585 = vadd.f32 %v581, %v44
  %v586 = vadd.f32 %v582, %v45
  %v587 = vsel %vm445, %v583, -inf
  %588 = vmax.xlane.f32.xlu0 %v587
  %v589 = vpop.xlane.xlu0 %588
  %v590 = vsel %vm445, %v584, -inf
  %591 = vmax.xlane.f32.xlu0 %v590
  %v592 = vpop.xlane.xlu0 %591
  %v593 = vsel %vm445, %v585, -inf
  %594 = vmax.xlane.f32.xlu0 %v593
  %v595 = vpop.xlane.xlu0 %594
  %v596 = vsel %vm445, %v586, -inf
  %597 = vmax.xlane.f32.xlu0 %v596
  %v598 = vpop.xlane.xlu0 %597
  %v599 = vsub.f32 %v583, %v589
  %v600 = vsub.f32 %v584, %v592
  %v601 = vsub.f32 %v585, %v595
  %v602 = vsub.f32 %v586, %v598
  %v603 = vmul.f32 %v599, 1.442695
  %v604 = vpow.pop %v603
  %v605 = vmul.f32 %v600, 1.442695
  %v606 = vpow.pop %v605
  %v607 = vmul.f32 %v601, 1.442695
  %v608 = vpow.pop %v607
  %v609 = vmul.f32 %v602, 1.442695
  %v610 = vpow.pop %v609
  %v611 = vsel %vm445, %v604, 0.0
  %612 = vadd.xlane.f32.xlu0 %v611
  %v613 = vpop.xlane.xlu0 %612
  %v614 = vsel %vm445, %v606, 0.0
  %615 = vadd.xlane.f32.xlu0 %v614
  %v616 = vpop.xlane.xlu0 %615
  %v617 = vsel %vm445, %v608, 0.0
  %618 = vadd.xlane.f32.xlu0 %v617
  %v619 = vpop.xlane.xlu0 %618
  %v620 = vsel %vm445, %v610, 0.0
  %621 = vadd.xlane.f32.xlu0 %v620
  %v622 = vpop.xlane.xlu0 %621
  %v623 = vpack.c.bf16 %v606, %v604
  %v624 = vpack.c.bf16 %v610, %v608
  %627 = vrot.lane.b32.xlu0 %v221, 112
  %v628 = vpop.permute.xlu0 %627
  %629 = vrot.lane.b32.xlu0 %v222, 112
  %v630 = vpop.permute.xlu0 %629
  %v634 = vsel %vm445, %v623, 0
  %v637 = vsel %vm445, %v624, 0
  %639 = vmatprep.subr.bf16.mxu0 0
  %640 = vmatpush1.bf16.msra.mxu0 0
  %641 = vmatprep.subr.bf16.mxu0 0
  %642 = vmatpush1.bf16.msra.mxu0 0
  %643 = vmatprep.subr.bf16.mxu0 0
  %644 = vmatpush1.bf16.msra.mxu0 0
  %645 = vmatprep.subr.bf16.mxu0 0
  %646 = vmatpush1.bf16.msra.mxu0 0
  %647 = vmatprep.subr.bf16.mxu0 0
  %648 = vmatpush1.bf16.msra.mxu0 0
  %649 = vmatprep.subr.bf16.mxu0 0
  %650 = vmatpush1.bf16.msra.mxu0 0
  %651 = vmatprep.subr.bf16.mxu0 0
  %652 = vmatpush1.bf16.msra.mxu0 %v630
  %653 = vmatprep.subr.bf16.mxu0 0
  %654 = vmatpush1.bf16.msra.mxu0 %v628
  %655 = vmatprep.subr.bf16.mxu0 0
  %656 = vmatpush2.bf16.msra.mxu0 0
  %657 = vmatprep.subr.bf16.mxu0 0
  %658 = vmatpush2.bf16.msra.mxu0 0
  %659 = vmatprep.subr.bf16.mxu0 0
  %660 = vmatpush2.bf16.msra.mxu0 0
  %661 = vmatprep.subr.bf16.mxu0 0
  %662 = vmatpush2.bf16.msra.mxu0 0
  %663 = vmatprep.subr.bf16.mxu0 0
  %664 = vmatpush2.bf16.msra.mxu0 0
  %665 = vmatprep.subr.bf16.mxu0 0
  %666 = vmatpush2.bf16.msra.mxu0 0
  %667 = vmatprep.subr.bf16.mxu0 0
  %668 = vmatpush2.bf16.msra.mxu0 0
  %669 = vmatprep.subr.bf16.mxu0 0
  %670 = vmatpush2.bf16.msra.mxu0 0
  %671 = vmatprep.mubr.bf16.mxu0 0
  %672 = vmatmul.mubr.bf16.gmra.mxu0 %v634
  %v673 = vpop.f32.mrf.mxu0
  %v674 = vadd.f32 0.0, %v673
  %v675 = vpop.f32.mrf.mxu0
  %v676 = vpop.f32.mrf.mxu0
  %v677 = vadd.f32 0.0, %v676
  %v678 = vpop.f32.mrf.mxu0
  %679 = vmatprep.mubr.bf16.mxu0 0
  %680 = vmatmul.mubr.bf16.gmra.mxu0 %v637
  %v681 = vpop.f32.mrf.mxu0
  %v682 = vadd.f32 0.0, %v681
  %v683 = vpop.f32.mrf.mxu0
  %v684 = vpop.f32.mrf.mxu0
  %v685 = vadd.f32 0.0, %v684
  %v686 = vpop.f32.mrf.mxu0
  %687 = vdwg.mxu0
  %v688 = vrcp.pop %v613
  %v689 = vrcp.pop %v616
  %v690 = vrcp.pop %v619
  %v691 = vrcp.pop %v622
  %v692 = vmul.f32 %v674, %v688
  %v693 = vmul.f32 %v677, %v689
  %v694 = vmul.f32 %v682, %v690
  %v695 = vmul.f32 %v685, %v691
  %696 = vset.pattern.permute.xlu0 2
  %697 = vperm.xlu0 %696, %v344
  %v698 = vpop.permute.xlu0 %697
  %700 = vset.pattern.permute.xlu0 2
  %701 = vperm.xlu0 %700, %v347
  %v702 = vpop.permute.xlu0 %701
  %704 = vset.pattern.permute.xlu0 2
  %705 = vperm.xlu0 %704, %v352
  %v706 = vpop.permute.xlu0 %705
  %708 = vset.pattern.permute.xlu0 2
  %709 = vperm.xlu0 %708, %v355
  %v710 = vpop.permute.xlu0 %709
  %v712 = vlaneseq
  %v713 = vshrl.u32 %v712, 7
  %v714 = vsub.s32 2, %v713
  %v715 = vrot.slane %v396, %v714
  %v716 = vadd.f32 %v698, %v715
  %v717 = vadd.f32 %v702, %v715
  %v718 = vadd.f32 %v706, %v715
  %v719 = vadd.f32 %v710, %v715
  %vm720 = vcmp.gt.f32.partialorder %v716, 0.0
  %vm721 = vcmp.gt.f32.partialorder %v717, 0.0
  %vm722 = vcmp.gt.f32.partialorder %v718, 0.0
  %vm723 = vcmp.gt.f32.partialorder %v719, 0.0
  %v724 = vmul.f32 %v716, 0.2
  %v725 = vmul.f32 %v717, 0.2
  %v726 = vmul.f32 %v718, 0.2
  %v727 = vmul.f32 %v719, 0.2
  %v728 = vsel %vm720, %v716, %v724
  %v729 = vsel %vm721, %v717, %v725
  %v730 = vsel %vm722, %v718, %v726
  %v731 = vsel %vm723, %v719, %v727
  %v732 = vadd.f32 %v728, %v42
  %v733 = vadd.f32 %v729, %v43
  %v734 = vadd.f32 %v730, %v44
  %v735 = vadd.f32 %v731, %v45
  %v736 = vsel %vm445, %v732, -inf
  %737 = vmax.xlane.f32.xlu0 %v736
  %v738 = vpop.xlane.xlu0 %737
  %v739 = vsel %vm445, %v733, -inf
  %740 = vmax.xlane.f32.xlu0 %v739
  %v741 = vpop.xlane.xlu0 %740
  %v742 = vsel %vm445, %v734, -inf
  %743 = vmax.xlane.f32.xlu0 %v742
  %v744 = vpop.xlane.xlu0 %743
  %v745 = vsel %vm445, %v735, -inf
  %746 = vmax.xlane.f32.xlu0 %v745
  %v747 = vpop.xlane.xlu0 %746
  %v748 = vsub.f32 %v732, %v738
  %v749 = vsub.f32 %v733, %v741
  %v750 = vsub.f32 %v734, %v744
  %v751 = vsub.f32 %v735, %v747
  %v752 = vmul.f32 %v748, 1.442695
  %v753 = vpow.pop %v752
  %v754 = vmul.f32 %v749, 1.442695
  %v755 = vpow.pop %v754
  %v756 = vmul.f32 %v750, 1.442695
  %v757 = vpow.pop %v756
  %v758 = vmul.f32 %v751, 1.442695
  %v759 = vpow.pop %v758
  %v760 = vsel %vm445, %v753, 0.0
  %761 = vadd.xlane.f32.xlu0 %v760
  %v762 = vpop.xlane.xlu0 %761
  %v763 = vsel %vm445, %v755, 0.0
  %764 = vadd.xlane.f32.xlu0 %v763
  %v765 = vpop.xlane.xlu0 %764
  %v766 = vsel %vm445, %v757, 0.0
  %767 = vadd.xlane.f32.xlu0 %v766
  %v768 = vpop.xlane.xlu0 %767
  %v769 = vsel %vm445, %v759, 0.0
  %770 = vadd.xlane.f32.xlu0 %v769
  %v771 = vpop.xlane.xlu0 %770
  %v772 = vpack.c.bf16 %v755, %v753
  %v773 = vpack.c.bf16 %v759, %v757
  %774 = vrot.lane.b32.xlu0 %v221, 96
  %v775 = vpop.permute.xlu0 %774
  %776 = vrot.lane.b32.xlu0 %v222, 96
  %v777 = vpop.permute.xlu0 %776
  %v781 = vsel %vm445, %v772, 0
  %v784 = vsel %vm445, %v773, 0
  %786 = vmatprep.subr.bf16.mxu0 0
  %787 = vmatpush1.bf16.msra.mxu0 0
  %788 = vmatprep.subr.bf16.mxu0 0
  %789 = vmatpush1.bf16.msra.mxu0 0
  %790 = vmatprep.subr.bf16.mxu0 0
  %791 = vmatpush1.bf16.msra.mxu0 0
  %792 = vmatprep.subr.bf16.mxu0 0
  %793 = vmatpush1.bf16.msra.mxu0 0
  %794 = vmatprep.subr.bf16.mxu0 0
  %795 = vmatpush1.bf16.msra.mxu0 0
  %796 = vmatprep.subr.bf16.mxu0 0
  %797 = vmatpush1.bf16.msra.mxu0 0
  %798 = vmatprep.subr.bf16.mxu0 0
  %799 = vmatpush1.bf16.msra.mxu0 %v777
  %800 = vmatprep.subr.bf16.mxu0 0
  %801 = vmatpush1.bf16.msra.mxu0 %v775
  %802 = vmatprep.subr.bf16.mxu0 0
  %803 = vmatpush2.bf16.msra.mxu0 0
  %804 = vmatprep.subr.bf16.mxu0 0
  %805 = vmatpush2.bf16.msra.mxu0 0
  %806 = vmatprep.subr.bf16.mxu0 0
  %807 = vmatpush2.bf16.msra.mxu0 0
  %808 = vmatprep.subr.bf16.mxu0 0
  %809 = vmatpush2.bf16.msra.mxu0 0
  %810 = vmatprep.subr.bf16.mxu0 0
  %811 = vmatpush2.bf16.msra.mxu0 0
  %812 = vmatprep.subr.bf16.mxu0 0
  %813 = vmatpush2.bf16.msra.mxu0 0
  %814 = vmatprep.subr.bf16.mxu0 0
  %815 = vmatpush2.bf16.msra.mxu0 0
  %816 = vmatprep.subr.bf16.mxu0 0
  %817 = vmatpush2.bf16.msra.mxu0 0
  %818 = vmatprep.mubr.bf16.mxu0 0
  %819 = vmatmul.mubr.bf16.gmra.mxu0 %v781
  %v820 = vpop.f32.mrf.mxu0
  %v821 = vadd.f32 0.0, %v820
  %v822 = vpop.f32.mrf.mxu0
  %v823 = vpop.f32.mrf.mxu0
  %v824 = vadd.f32 0.0, %v823
  %v825 = vpop.f32.mrf.mxu0
  %826 = vmatprep.mubr.bf16.mxu0 0
  %827 = vmatmul.mubr.bf16.gmra.mxu0 %v784
  %v828 = vpop.f32.mrf.mxu0
  %v829 = vadd.f32 0.0, %v828
  %v830 = vpop.f32.mrf.mxu0
  %v831 = vpop.f32.mrf.mxu0
  %v832 = vadd.f32 0.0, %v831
  %v833 = vpop.f32.mrf.mxu0
  %834 = vdwg.mxu0
  %v835 = vrcp.pop %v762
  %v836 = vrcp.pop %v765
  %v837 = vrcp.pop %v768
  %v838 = vrcp.pop %v771
  %v839 = vmul.f32 %v821, %v835
  %v840 = vmul.f32 %v824, %v836
  %v841 = vmul.f32 %v829, %v837
  %v842 = vmul.f32 %v832, %v838
  %843 = vset.pattern.permute.xlu0 3
  %844 = vperm.xlu0 %843, %v344
  %v845 = vpop.permute.xlu0 %844
  %847 = vset.pattern.permute.xlu0 3
  %848 = vperm.xlu0 %847, %v347
  %v849 = vpop.permute.xlu0 %848
  %851 = vset.pattern.permute.xlu0 3
  %852 = vperm.xlu0 %851, %v352
  %v853 = vpop.permute.xlu0 %852
  %855 = vset.pattern.permute.xlu0 3
  %856 = vperm.xlu0 %855, %v355
  %v857 = vpop.permute.xlu0 %856
  %v859 = vlaneseq
  %v860 = vshrl.u32 %v859, 7
  %v861 = vsub.s32 3, %v860
  %v862 = vrot.slane %v396, %v861
  %v863 = vadd.f32 %v845, %v862
  %v864 = vadd.f32 %v849, %v862
  %v865 = vadd.f32 %v853, %v862
  %v866 = vadd.f32 %v857, %v862
  %vm867 = vcmp.gt.f32.partialorder %v863, 0.0
  %vm868 = vcmp.gt.f32.partialorder %v864, 0.0
  %vm869 = vcmp.gt.f32.partialorder %v865, 0.0
  %vm870 = vcmp.gt.f32.partialorder %v866, 0.0
  %v871 = vmul.f32 %v863, 0.2
  %v872 = vmul.f32 %v864, 0.2
  %v873 = vmul.f32 %v865, 0.2
  %v874 = vmul.f32 %v866, 0.2
  %v875 = vsel %vm867, %v863, %v871
  %v876 = vsel %vm868, %v864, %v872
  %v877 = vsel %vm869, %v865, %v873
  %v878 = vsel %vm870, %v866, %v874
  %v879 = vadd.f32 %v875, %v42
  %v880 = vadd.f32 %v876, %v43
  %v881 = vadd.f32 %v877, %v44
  %v882 = vadd.f32 %v878, %v45
  %v883 = vsel %vm445, %v879, -inf
  %884 = vmax.xlane.f32.xlu0 %v883
  %v885 = vpop.xlane.xlu0 %884
  %v886 = vsel %vm445, %v880, -inf
  %887 = vmax.xlane.f32.xlu0 %v886
  %v888 = vpop.xlane.xlu0 %887
  %v889 = vsel %vm445, %v881, -inf
  %890 = vmax.xlane.f32.xlu0 %v889
  %v891 = vpop.xlane.xlu0 %890
  %v892 = vsel %vm445, %v882, -inf
  %893 = vmax.xlane.f32.xlu0 %v892
  %v894 = vpop.xlane.xlu0 %893
  %v895 = vsub.f32 %v879, %v885
  %v896 = vsub.f32 %v880, %v888
  %v897 = vsub.f32 %v881, %v891
  %v898 = vsub.f32 %v882, %v894
  %v899 = vmul.f32 %v895, 1.442695
  %v900 = vpow.pop %v899
  %v901 = vmul.f32 %v896, 1.442695
  %v902 = vpow.pop %v901
  %v903 = vmul.f32 %v897, 1.442695
  %v904 = vpow.pop %v903
  %v905 = vmul.f32 %v898, 1.442695
  %v906 = vpow.pop %v905
  %v907 = vsel %vm445, %v900, 0.0
  %908 = vadd.xlane.f32.xlu0 %v907
  %v909 = vpop.xlane.xlu0 %908
  %v910 = vsel %vm445, %v902, 0.0
  %911 = vadd.xlane.f32.xlu0 %v910
  %v912 = vpop.xlane.xlu0 %911
  %v913 = vsel %vm445, %v904, 0.0
  %914 = vadd.xlane.f32.xlu0 %v913
  %v915 = vpop.xlane.xlu0 %914
  %v916 = vsel %vm445, %v906, 0.0
  %917 = vadd.xlane.f32.xlu0 %v916
  %v918 = vpop.xlane.xlu0 %917
  %v919 = vpack.c.bf16 %v902, %v900
  %v920 = vpack.c.bf16 %v906, %v904
  %921 = vrot.lane.b32.xlu0 %v221, 80
  %v922 = vpop.permute.xlu0 %921
  %923 = vrot.lane.b32.xlu0 %v222, 80
  %v924 = vpop.permute.xlu0 %923
  %v928 = vsel %vm445, %v919, 0
  %v931 = vsel %vm445, %v920, 0
  %933 = vmatprep.subr.bf16.mxu0 0
  %934 = vmatpush1.bf16.msra.mxu0 0
  %935 = vmatprep.subr.bf16.mxu0 0
  %936 = vmatpush1.bf16.msra.mxu0 0
  %937 = vmatprep.subr.bf16.mxu0 0
  %938 = vmatpush1.bf16.msra.mxu0 0
  %939 = vmatprep.subr.bf16.mxu0 0
  %940 = vmatpush1.bf16.msra.mxu0 0
  %941 = vmatprep.subr.bf16.mxu0 0
  %942 = vmatpush1.bf16.msra.mxu0 0
  %943 = vmatprep.subr.bf16.mxu0 0
  %944 = vmatpush1.bf16.msra.mxu0 0
  %945 = vmatprep.subr.bf16.mxu0 0
  %946 = vmatpush1.bf16.msra.mxu0 %v924
  %947 = vmatprep.subr.bf16.mxu0 0
  %948 = vmatpush1.bf16.msra.mxu0 %v922
  %949 = vmatprep.subr.bf16.mxu0 0
  %950 = vmatpush2.bf16.msra.mxu0 0
  %951 = vmatprep.subr.bf16.mxu0 0
  %952 = vmatpush2.bf16.msra.mxu0 0
  %953 = vmatprep.subr.bf16.mxu0 0
  %954 = vmatpush2.bf16.msra.mxu0 0
  %955 = vmatprep.subr.bf16.mxu0 0
  %956 = vmatpush2.bf16.msra.mxu0 0
  %957 = vmatprep.subr.bf16.mxu0 0
  %958 = vmatpush2.bf16.msra.mxu0 0
  %959 = vmatprep.subr.bf16.mxu0 0
  %960 = vmatpush2.bf16.msra.mxu0 0
  %961 = vmatprep.subr.bf16.mxu0 0
  %962 = vmatpush2.bf16.msra.mxu0 0
  %963 = vmatprep.subr.bf16.mxu0 0
  %964 = vmatpush2.bf16.msra.mxu0 0
  %965 = vmatprep.mubr.bf16.mxu0 0
  %966 = vmatmul.mubr.bf16.gmra.mxu0 %v928
  %v967 = vpop.f32.mrf.mxu0
  %v968 = vadd.f32 0.0, %v967
  %v969 = vpop.f32.mrf.mxu0
  %v970 = vpop.f32.mrf.mxu0
  %v971 = vadd.f32 0.0, %v970
  %v972 = vpop.f32.mrf.mxu0
  %973 = vmatprep.mubr.bf16.mxu0 0
  %974 = vmatmul.mubr.bf16.gmra.mxu0 %v931
  %v975 = vpop.f32.mrf.mxu0
  %v976 = vadd.f32 0.0, %v975
  %v977 = vpop.f32.mrf.mxu0
  %v978 = vpop.f32.mrf.mxu0
  %v979 = vadd.f32 0.0, %v978
  %v980 = vpop.f32.mrf.mxu0
  %981 = vdwg.mxu0
  %v982 = vrcp.pop %v909
  %v983 = vrcp.pop %v912
  %v984 = vrcp.pop %v915
  %v985 = vrcp.pop %v918
  %v986 = vmul.f32 %v968, %v982
  %v987 = vmul.f32 %v971, %v983
  %v988 = vmul.f32 %v976, %v984
  %v989 = vmul.f32 %v979, %v985
  %994 = vrot.lane.b32.xlu0 %v692, 16
  %v995 = vpop.permute.xlu0 %994
  %996 = vrot.lane.b32.xlu0 %v693, 16
  %v997 = vpop.permute.xlu0 %996
  %998 = vrot.lane.b32.xlu0 %v694, 16
  %v999 = vpop.permute.xlu0 %998
  %1000 = vrot.lane.b32.xlu0 %v695, 16
  %v1001 = vpop.permute.xlu0 %1000
  %1010 = vrot.lane.b32.xlu0 %v839, 32
  %v1011 = vpop.permute.xlu0 %1010
  %1012 = vrot.lane.b32.xlu0 %v840, 32
  %v1013 = vpop.permute.xlu0 %1012
  %1014 = vrot.lane.b32.xlu0 %v841, 32
  %v1015 = vpop.permute.xlu0 %1014
  %1016 = vrot.lane.b32.xlu0 %v842, 32
  %v1017 = vpop.permute.xlu0 %1016
  %1026 = vrot.lane.b32.xlu0 %v986, 48
  %v1027 = vpop.permute.xlu0 %1026
  %1028 = vrot.lane.b32.xlu0 %v987, 48
  %v1029 = vpop.permute.xlu0 %1028
  %1030 = vrot.lane.b32.xlu0 %v988, 48
  %v1031 = vpop.permute.xlu0 %1030
  %1032 = vrot.lane.b32.xlu0 %v989, 48
  %v1033 = vpop.permute.xlu0 %1032
  %v1038 = vsel %vm98, %v543, %v995
  %v1039 = vsel %vm98, %v544, %v997
  %v1040 = vsel %vm98, %v545, %v999
  %v1041 = vsel %vm98, %v546, %v1001
  %v1042 = vsel %vm445, %v1038, %v1011
  %v1043 = vsel %vm445, %v1039, %v1013
  %v1044 = vsel %vm445, %v1040, %v1015
  %v1045 = vsel %vm445, %v1041, %v1017
  %vm1046 = vcmask 392192
  %v1047 = vsel %vm1046, %v1042, %v1027
  %v1048 = vsel %vm1046, %v1043, %v1029
  %v1049 = vsel %vm1046, %v1044, %v1031
  %v1050 = vsel %vm1046, %v1045, %v1033
  %v1051 = vadd.f32 %v1047, %v264
  %v1052 = vadd.f32 %v1048, %v267
  %v1053 = vadd.f32 %v1049, %v272
  %v1054 = vadd.f32 %v1050, %v275
  %v1055 = vadd.f32 %v1051, %v78
  %v1056 = vadd.f32 %v1052, %v78
  %v1057 = vadd.f32 %v1053, %v78
  %v1058 = vadd.f32 %v1054, %v78
  %vm1059 = vcmp.gt.f32.partialorder %v1055, 0.0
  %vm1060 = vcmp.gt.f32.partialorder %v1056, 0.0
  %vm1061 = vcmp.gt.f32.partialorder %v1057, 0.0
  %vm1062 = vcmp.gt.f32.partialorder %v1058, 0.0
  %v1063 = vmul.f32 %v1055, 1.442695
  %v1064 = vpow.pop %v1063
  %v1065 = vmul.f32 %v1056, 1.442695
  %v1066 = vpow.pop %v1065
  %v1067 = vmul.f32 %v1057, 1.442695
  %v1068 = vpow.pop %v1067
  %v1069 = vmul.f32 %v1058, 1.442695
  %v1070 = vpow.pop %v1069
  %v1071 = vsub.f32 %v1064, 1.0
  %v1072 = vsub.f32 %v1066, 1.0
  %v1073 = vsub.f32 %v1068, 1.0
  %v1074 = vsub.f32 %v1070, 1.0
  %v1075 = vsel %vm1059, %v1055, %v1071
  %v1076 = vsel %vm1060, %v1056, %v1072
  %v1077 = vsel %vm1061, %v1057, %v1073
  %v1078 = vsel %vm1062, %v1058, %v1074
  %v1079 = vpack.c.bf16 %v1076, %v1075
  %v1080 = vpack.c.bf16 %v1078, %v1077
  %v1089 = vunpack.c.l.b16 %v61
  %v1090 = vunpack.c.l.b16 %v62
  %v1091 = vunpack.c.l.b16 %v63
  %v1092 = vunpack.c.l.b16 %v64
  %v1093 = vunpack.c.l.b16 %v65
  %v1094 = vunpack.c.l.b16 %v66
  %v1095 = vunpack.c.l.b16 %v67
  %v1096 = vunpack.c.l.b16 %v68
  %v1097 = vpack.c.b16 %v1090, %v1089
  %v1098 = vpack.c.b16 %v1092, %v1091
  %v1099 = vpack.c.b16 %v1094, %v1093
  %v1100 = vpack.c.b16 %v1096, %v1095
  %v1106 = vsel %vm302, %v1079, 0
  %v1109 = vsel %vm302, %v1080, 0
  %1111 = vmatprep.subr.bf16.mxu0 0
  %1112 = vmatpush1.bf16.msra.mxu0 0
  %1113 = vmatprep.subr.bf16.mxu0 0
  %1114 = vmatpush1.bf16.msra.mxu0 0
  %1115 = vmatprep.subr.bf16.mxu0 0
  %1116 = vmatpush1.bf16.msra.mxu0 0
  %1117 = vmatprep.subr.bf16.mxu0 0
  %1118 = vmatpush1.bf16.msra.mxu0 0
  %1119 = vmatprep.subr.bf16.mxu0 0
  %1120 = vmatpush1.bf16.msra.mxu0 %v1100
  %1121 = vmatprep.subr.bf16.mxu0 0
  %1122 = vmatpush1.bf16.msra.mxu0 %v1099
  %1123 = vmatprep.subr.bf16.mxu0 0
  %1124 = vmatpush1.bf16.msra.mxu0 %v1098
  %1125 = vmatprep.subr.bf16.mxu0 0
  %1126 = vmatpush1.bf16.msra.mxu0 %v1097
  %1127 = vmatprep.subr.bf16.mxu0 0
  %1128 = vmatpush2.bf16.msra.mxu0 0
  %1129 = vmatprep.subr.bf16.mxu0 0
  %1130 = vmatpush2.bf16.msra.mxu0 0
  %1131 = vmatprep.subr.bf16.mxu0 0
  %1132 = vmatpush2.bf16.msra.mxu0 0
  %1133 = vmatprep.subr.bf16.mxu0 0
  %1134 = vmatpush2.bf16.msra.mxu0 0
  %1135 = vmatprep.subr.bf16.mxu0 0
  %1136 = vmatpush2.bf16.msra.mxu0 0
  %1137 = vmatprep.subr.bf16.mxu0 0
  %1138 = vmatpush2.bf16.msra.mxu0 0
  %1139 = vmatprep.subr.bf16.mxu0 0
  %1140 = vmatpush2.bf16.msra.mxu0 0
  %1141 = vmatprep.subr.bf16.mxu0 0
  %1142 = vmatpush2.bf16.msra.mxu0 0
  %1143 = vmatprep.mubr.bf16.mxu0 0
  %1144 = vmatmul.mubr.bf16.gmra.mxu0 %v1106
  %v1145 = vpop.f32.mrf.mxu0
  %v1146 = vadd.f32 0.0, %v1145
  %v1147 = vpop.f32.mrf.mxu0
  %v1148 = vpop.f32.mrf.mxu0
  %v1149 = vadd.f32 0.0, %v1148
  %v1150 = vpop.f32.mrf.mxu0
  %1151 = vmatprep.mubr.bf16.mxu0 0
  %1152 = vmatmul.mubr.bf16.gmra.mxu0 %v1109
  %v1153 = vpop.f32.mrf.mxu0
  %v1154 = vadd.f32 0.0, %v1153
  %v1155 = vpop.f32.mrf.mxu0
  %v1156 = vpop.f32.mrf.mxu0
  %v1157 = vadd.f32 0.0, %v1156
  %v1158 = vpop.f32.mrf.mxu0
  %1159 = vdwg.mxu0
  %v1160 = vsub.f32 %v1146, %v154
  %v1161 = vsub.f32 %v1149, %v155
  %v1162 = vsub.f32 %v1154, %v156
  %v1163 = vsub.f32 %v1157, %v157
  %v1164 = vsub.f32 %v1160, %v154
  %v1165 = vsub.f32 %v1161, %v155
  %v1166 = vsub.f32 %v1162, %v156
  %v1167 = vsub.f32 %v1163, %v157
  %v1168 = vadd.f32 %v154, %v1164
  %v1169 = vadd.f32 %v155, %v1165
  %v1170 = vadd.f32 %v156, %v1166
  %v1171 = vadd.f32 %v157, %v1167
  %v1172 = vadd.f32 %v154, %v1168
  %v1173 = vadd.f32 %v155, %v1169
  %v1174 = vadd.f32 %v156, %v1170
  %v1175 = vadd.f32 %v157, %v1171
  %v1176 = vpack.c.bf16 %v1173, %v1172
  %v1177 = vpack.c.bf16 %v1175, %v1174
  %v1179 = vsel %vm98, %v1176, 0
  %v1182 = vsel %vm98, %v1177, 0
  %1184 = vmatprep.subr.bf16.mxu0 0
  %1185 = vmatpush1.bf16.msra.mxu0 0
  %1186 = vmatprep.subr.bf16.mxu0 0
  %1187 = vmatpush1.bf16.msra.mxu0 0
  %1188 = vmatprep.subr.bf16.mxu0 0
  %1189 = vmatpush1.bf16.msra.mxu0 0
  %1190 = vmatprep.subr.bf16.mxu0 0
  %1191 = vmatpush1.bf16.msra.mxu0 0
  %1192 = vmatprep.subr.bf16.mxu0 0
  %1193 = vmatpush1.bf16.msra.mxu0 0
  %1194 = vmatprep.subr.bf16.mxu0 0
  %1195 = vmatpush1.bf16.msra.mxu0 0
  %1196 = vmatprep.subr.bf16.mxu0 0
  %1197 = vmatpush1.bf16.msra.mxu0 0
  %1198 = vmatprep.subr.bf16.mxu0 0
  %1199 = vmatpush1.bf16.msra.mxu0 %v164
  %1200 = vmatprep.subr.bf16.mxu0 0
  %1201 = vmatpush2.bf16.msra.mxu0 0
  %1202 = vmatprep.subr.bf16.mxu0 0
  %1203 = vmatpush2.bf16.msra.mxu0 0
  %1204 = vmatprep.subr.bf16.mxu0 0
  %1205 = vmatpush2.bf16.msra.mxu0 0
  %1206 = vmatprep.subr.bf16.mxu0 0
  %1207 = vmatpush2.bf16.msra.mxu0 0
  %1208 = vmatprep.subr.bf16.mxu0 0
  %1209 = vmatpush2.bf16.msra.mxu0 0
  %1210 = vmatprep.subr.bf16.mxu0 0
  %1211 = vmatpush2.bf16.msra.mxu0 0
  %1212 = vmatprep.subr.bf16.mxu0 0
  %1213 = vmatpush2.bf16.msra.mxu0 0
  %1214 = vmatprep.subr.bf16.mxu0 0
  %1215 = vmatpush2.bf16.msra.mxu0 0
  %1216 = vmatprep.mubr.bf16.mxu0 0
  %1217 = vmatmul.mubr.bf16.gmra.mxu0 %v1179
  %v1218 = vpop.f32.mrf.mxu0
  %v1219 = vadd.f32 0.0, %v1218
  %v1220 = vpop.f32.mrf.mxu0
  %v1221 = vpop.f32.mrf.mxu0
  %v1222 = vadd.f32 0.0, %v1221
  %v1223 = vpop.f32.mrf.mxu0
  %1224 = vmatprep.mubr.bf16.mxu0 0
  %1225 = vmatmul.mubr.bf16.gmra.mxu0 %v1182
  %v1226 = vpop.f32.mrf.mxu0
  %v1227 = vadd.f32 0.0, %v1226
  %v1228 = vpop.f32.mrf.mxu0
  %v1229 = vpop.f32.mrf.mxu0
  %v1230 = vadd.f32 0.0, %v1229
  %v1231 = vpop.f32.mrf.mxu0
  %1232 = vdwg.mxu0
  %v1233 = vpack.c.bf16 %v1222, %v1219
  %v1234 = vpack.c.bf16 %v1230, %v1227
  %1235 = vmatprep.subr.bf16.mxu0 0
  %1236 = vmatpush1.bf16.msra.mxu0 0
  %1237 = vmatprep.subr.bf16.mxu0 0
  %1238 = vmatpush1.bf16.msra.mxu0 0
  %1239 = vmatprep.subr.bf16.mxu0 0
  %1240 = vmatpush1.bf16.msra.mxu0 0
  %1241 = vmatprep.subr.bf16.mxu0 0
  %1242 = vmatpush1.bf16.msra.mxu0 0
  %1243 = vmatprep.subr.bf16.mxu0 0
  %1244 = vmatpush1.bf16.msra.mxu0 0
  %1245 = vmatprep.subr.bf16.mxu0 0
  %1246 = vmatpush1.bf16.msra.mxu0 0
  %1247 = vmatprep.subr.bf16.mxu0 0
  %1248 = vmatpush1.bf16.msra.mxu0 0
  %1249 = vmatprep.subr.bf16.mxu0 0
  %1250 = vmatpush1.bf16.msra.mxu0 %v227
  %1251 = vmatprep.subr.bf16.mxu0 0
  %1252 = vmatpush2.bf16.msra.mxu0 0
  %1253 = vmatprep.subr.bf16.mxu0 0
  %1254 = vmatpush2.bf16.msra.mxu0 0
  %1255 = vmatprep.subr.bf16.mxu0 0
  %1256 = vmatpush2.bf16.msra.mxu0 0
  %1257 = vmatprep.subr.bf16.mxu0 0
  %1258 = vmatpush2.bf16.msra.mxu0 0
  %1259 = vmatprep.subr.bf16.mxu0 0
  %1260 = vmatpush2.bf16.msra.mxu0 0
  %1261 = vmatprep.subr.bf16.mxu0 0
  %1262 = vmatpush2.bf16.msra.mxu0 0
  %1263 = vmatprep.subr.bf16.mxu0 0
  %1264 = vmatpush2.bf16.msra.mxu0 0
  %1265 = vmatprep.subr.bf16.mxu0 0
  %1266 = vmatpush2.bf16.msra.mxu0 0
  %1267 = vmatprep.mubr.bf16.mxu0 0
  %1268 = vmatmul.mubr.bf16.gmra.mxu0 %v1179
  %v1269 = vpop.f32.mrf.mxu0
  %v1270 = vadd.f32 0.0, %v1269
  %v1271 = vpop.f32.mrf.mxu0
  %v1272 = vpop.f32.mrf.mxu0
  %v1273 = vadd.f32 0.0, %v1272
  %v1274 = vpop.f32.mrf.mxu0
  %1275 = vmatprep.mubr.bf16.mxu0 0
  %1276 = vmatmul.mubr.bf16.gmra.mxu0 %v1182
  %v1277 = vpop.f32.mrf.mxu0
  %v1278 = vadd.f32 0.0, %v1277
  %v1279 = vpop.f32.mrf.mxu0
  %v1280 = vpop.f32.mrf.mxu0
  %v1281 = vadd.f32 0.0, %v1280
  %v1282 = vpop.f32.mrf.mxu0
  %1283 = vdwg.mxu0
  %v1285 = vsel %vm302, %v1233, 0
  %v1288 = vsel %vm302, %v1234, 0
  %1290 = vmatprep.subr.bf16.mxu0 0
  %1291 = vmatpush1.bf16.msra.mxu0 0
  %1292 = vmatprep.subr.bf16.mxu0 0
  %1293 = vmatpush1.bf16.msra.mxu0 0
  %1294 = vmatprep.subr.bf16.mxu0 0
  %1295 = vmatpush1.bf16.msra.mxu0 0
  %1296 = vmatprep.subr.bf16.mxu0 0
  %1297 = vmatpush1.bf16.msra.mxu0 0
  %1298 = vmatprep.subr.bf16.mxu0 0
  %1299 = vmatpush1.bf16.msra.mxu0 %v297
  %1300 = vmatprep.subr.bf16.mxu0 0
  %1301 = vmatpush1.bf16.msra.mxu0 %v296
  %1302 = vmatprep.subr.bf16.mxu0 0
  %1303 = vmatpush1.bf16.msra.mxu0 %v295
  %1304 = vmatprep.subr.bf16.mxu0 0
  %1305 = vmatpush1.bf16.msra.mxu0 %v294
  %1306 = vmatprep.subr.bf16.mxu0 0
  %1307 = vmatpush2.bf16.msra.mxu0 0
  %1308 = vmatprep.subr.bf16.mxu0 0
  %1309 = vmatpush2.bf16.msra.mxu0 0
  %1310 = vmatprep.subr.bf16.mxu0 0
  %1311 = vmatpush2.bf16.msra.mxu0 0
  %1312 = vmatprep.subr.bf16.mxu0 0
  %1313 = vmatpush2.bf16.msra.mxu0 0
  %1314 = vmatprep.subr.bf16.mxu0 0
  %1315 = vmatpush2.bf16.msra.mxu0 0
  %1316 = vmatprep.subr.bf16.mxu0 0
  %1317 = vmatpush2.bf16.msra.mxu0 0
  %1318 = vmatprep.subr.bf16.mxu0 0
  %1319 = vmatpush2.bf16.msra.mxu0 0
  %1320 = vmatprep.subr.bf16.mxu0 0
  %1321 = vmatpush2.bf16.msra.mxu0 0
  %1322 = vmatprep.mubr.bf16.mxu0 0
  %1323 = vmatmul.mubr.bf16.gmra.mxu0 %v1285
  %v1324 = vpop.f32.mrf.mxu0
  %v1325 = vadd.f32 0.0, %v1324
  %v1326 = vpop.f32.mrf.mxu0
  %v1327 = vpop.f32.mrf.mxu0
  %v1328 = vadd.f32 0.0, %v1327
  %v1329 = vpop.f32.mrf.mxu0
  %1330 = vmatprep.mubr.bf16.mxu0 0
  %1331 = vmatmul.mubr.bf16.gmra.mxu0 %v1288
  %v1332 = vpop.f32.mrf.mxu0
  %v1333 = vadd.f32 0.0, %v1332
  %v1334 = vpop.f32.mrf.mxu0
  %v1335 = vpop.f32.mrf.mxu0
  %v1336 = vadd.f32 0.0, %v1335
  %v1337 = vpop.f32.mrf.mxu0
  %1338 = vdwg.mxu0
  %1339 = vmatprep.subr.bf16.mxu0 0
  %1340 = vmatpush1.bf16.xpose.msra.mxu0 0
  %1341 = vmatprep.subr.bf16.mxu0 0
  %1342 = vmatpush1.bf16.xpose.msra.mxu0 0
  %1343 = vmatprep.subr.bf16.mxu0 0
  %1344 = vmatpush1.bf16.xpose.msra.mxu0 0
  %1345 = vmatprep.subr.bf16.mxu0 0
  %1346 = vmatpush1.bf16.xpose.msra.mxu0 0
  %1347 = vmatprep.subr.bf16.mxu0 0
  %1348 = vmatpush1.bf16.xpose.msra.mxu0 0
  %1349 = vmatprep.subr.bf16.mxu0 0
  %1350 = vmatpush1.bf16.xpose.msra.mxu0 0
  %1351 = vmatprep.subr.bf16.mxu0 0
  %1352 = vmatpush1.bf16.xpose.msra.mxu0 %v1288
  %1353 = vmatprep.subr.bf16.mxu0 0
  %1354 = vmatpush1.bf16.xpose.msra.mxu0 %v1285
  %1355 = vmatprep.subr.bf16.mxu0 0
  %1356 = vmatpush2.bf16.xpose.msra.mxu0 0
  %1357 = vmatprep.subr.bf16.mxu0 0
  %1358 = vmatpush2.bf16.xpose.msra.mxu0 0
  %1359 = vmatprep.subr.bf16.mxu0 0
  %1360 = vmatpush2.bf16.xpose.msra.mxu0 0
  %1361 = vmatprep.subr.bf16.mxu0 0
  %1362 = vmatpush2.bf16.xpose.msra.mxu0 0
  %1363 = vmatprep.subr.bf16.mxu0 0
  %1364 = vmatpush2.bf16.xpose.msra.mxu0 0
  %1365 = vmatprep.subr.bf16.mxu0 0
  %1366 = vmatpush2.bf16.xpose.msra.mxu0 0
  %1367 = vmatprep.subr.bf16.mxu0 0
  %1368 = vmatpush2.bf16.xpose.msra.mxu0 0
  %1369 = vmatprep.subr.bf16.mxu0 0
  %1370 = vmatpush2.bf16.xpose.msra.mxu0 0
  %1371 = vmatprep.mubr.bf16.mxu0 0
  %1372 = vmatmul.mubr.bf16.gmra.mxu0 %v359
  %v1373 = vpop.f32.mrf.mxu0
  %v1374 = vadd.f32 0.0, %v1373
  %v1375 = vpop.f32.mrf.mxu0
  %v1376 = vpop.f32.mrf.mxu0
  %v1377 = vpop.f32.mrf.mxu0
  %1378 = vdwg.mxu0
  %1380 = vset.pattern.permute.xlu0 0
  %1381 = vperm.xlu0 %1380, %v1325
  %v1382 = vpop.permute.xlu0 %1381
  %1385 = vset.pattern.permute.xlu0 0
  %1386 = vperm.xlu0 %1385, %v1328
  %v1387 = vpop.permute.xlu0 %1386
  %1390 = vset.pattern.permute.xlu0 0
  %1391 = vperm.xlu0 %1390, %v1333
  %v1392 = vpop.permute.xlu0 %1391
  %1395 = vset.pattern.permute.xlu0 0
  %1396 = vperm.xlu0 %1395, %v1336
  %v1397 = vpop.permute.xlu0 %1396
  %v1399 = vlaneseq
  %v1400 = vshrl.u32 %v1399, 7
  %v1401 = vsub.s32 0, %v1400
  %v1402 = vrot.slane %v1374, %v1401
  %v1403 = vadd.f32 %v1382, %v1402
  %v1404 = vadd.f32 %v1387, %v1402
  %v1405 = vadd.f32 %v1392, %v1402
  %v1406 = vadd.f32 %v1397, %v1402
  %vm1407 = vcmp.gt.f32.partialorder %v1403, 0.0
  %vm1408 = vcmp.gt.f32.partialorder %v1404, 0.0
  %vm1409 = vcmp.gt.f32.partialorder %v1405, 0.0
  %vm1410 = vcmp.gt.f32.partialorder %v1406, 0.0
  %v1411 = vmul.f32 %v1403, 0.2
  %v1412 = vmul.f32 %v1404, 0.2
  %v1413 = vmul.f32 %v1405, 0.2
  %v1414 = vmul.f32 %v1406, 0.2
  %v1415 = vsel %vm1407, %v1403, %v1411
  %v1416 = vsel %vm1408, %v1404, %v1412
  %v1417 = vsel %vm1409, %v1405, %v1413
  %v1418 = vsel %vm1410, %v1406, %v1414
  %v1419 = vadd.f32 %v1415, %v42
  %v1420 = vadd.f32 %v1416, %v43
  %v1421 = vadd.f32 %v1417, %v44
  %v1422 = vadd.f32 %v1418, %v45
  %v1423 = vsel %vm445, %v1419, -inf
  %1424 = vmax.xlane.f32.xlu0 %v1423
  %v1425 = vpop.xlane.xlu0 %1424
  %v1426 = vsel %vm445, %v1420, -inf
  %1427 = vmax.xlane.f32.xlu0 %v1426
  %v1428 = vpop.xlane.xlu0 %1427
  %v1429 = vsel %vm445, %v1421, -inf
  %1430 = vmax.xlane.f32.xlu0 %v1429
  %v1431 = vpop.xlane.xlu0 %1430
  %v1432 = vsel %vm445, %v1422, -inf
  %1433 = vmax.xlane.f32.xlu0 %v1432
  %v1434 = vpop.xlane.xlu0 %1433
  %v1435 = vsub.f32 %v1419, %v1425
  %v1436 = vsub.f32 %v1420, %v1428
  %v1437 = vsub.f32 %v1421, %v1431
  %v1438 = vsub.f32 %v1422, %v1434
  %v1439 = vmul.f32 %v1435, 1.442695
  %v1440 = vpow.pop %v1439
  %v1441 = vmul.f32 %v1436, 1.442695
  %v1442 = vpow.pop %v1441
  %v1443 = vmul.f32 %v1437, 1.442695
  %v1444 = vpow.pop %v1443
  %v1445 = vmul.f32 %v1438, 1.442695
  %v1446 = vpow.pop %v1445
  %v1447 = vsel %vm445, %v1440, 0.0
  %1448 = vadd.xlane.f32.xlu0 %v1447
  %v1449 = vpop.xlane.xlu0 %1448
  %v1450 = vsel %vm445, %v1442, 0.0
  %1451 = vadd.xlane.f32.xlu0 %v1450
  %v1452 = vpop.xlane.xlu0 %1451
  %v1453 = vsel %vm445, %v1444, 0.0
  %1454 = vadd.xlane.f32.xlu0 %v1453
  %v1455 = vpop.xlane.xlu0 %1454
  %v1456 = vsel %vm445, %v1446, 0.0
  %1457 = vadd.xlane.f32.xlu0 %v1456
  %v1458 = vpop.xlane.xlu0 %1457
  %v1459 = vpack.c.bf16 %v1442, %v1440
  %v1460 = vpack.c.bf16 %v1446, %v1444
  %v1462 = vsel %vm445, %v1459, 0
  %v1465 = vsel %vm445, %v1460, 0
  %1467 = vmatprep.subr.bf16.mxu0 0
  %1468 = vmatpush1.bf16.msra.mxu0 0
  %1469 = vmatprep.subr.bf16.mxu0 0
  %1470 = vmatpush1.bf16.msra.mxu0 0
  %1471 = vmatprep.subr.bf16.mxu0 0
  %1472 = vmatpush1.bf16.msra.mxu0 0
  %1473 = vmatprep.subr.bf16.mxu0 0
  %1474 = vmatpush1.bf16.msra.mxu0 0
  %1475 = vmatprep.subr.bf16.mxu0 0
  %1476 = vmatpush1.bf16.msra.mxu0 0
  %1477 = vmatprep.subr.bf16.mxu0 0
  %1478 = vmatpush1.bf16.msra.mxu0 0
  %1479 = vmatprep.subr.bf16.mxu0 0
  %1480 = vmatpush1.bf16.msra.mxu0 %v1234
  %1481 = vmatprep.subr.bf16.mxu0 0
  %1482 = vmatpush1.bf16.msra.mxu0 %v1233
  %1483 = vmatprep.subr.bf16.mxu0 0
  %1484 = vmatpush2.bf16.msra.mxu0 0
  %1485 = vmatprep.subr.bf16.mxu0 0
  %1486 = vmatpush2.bf16.msra.mxu0 0
  %1487 = vmatprep.subr.bf16.mxu0 0
  %1488 = vmatpush2.bf16.msra.mxu0 0
  %1489 = vmatprep.subr.bf16.mxu0 0
  %1490 = vmatpush2.bf16.msra.mxu0 0
  %1491 = vmatprep.subr.bf16.mxu0 0
  %1492 = vmatpush2.bf16.msra.mxu0 0
  %1493 = vmatprep.subr.bf16.mxu0 0
  %1494 = vmatpush2.bf16.msra.mxu0 0
  %1495 = vmatprep.subr.bf16.mxu0 0
  %1496 = vmatpush2.bf16.msra.mxu0 0
  %1497 = vmatprep.subr.bf16.mxu0 0
  %1498 = vmatpush2.bf16.msra.mxu0 0
  %1499 = vmatprep.mubr.bf16.mxu0 0
  %1500 = vmatmul.mubr.bf16.gmra.mxu0 %v1462
  %v1501 = vpop.f32.mrf.mxu0
  %v1502 = vadd.f32 0.0, %v1501
  %v1503 = vpop.f32.mrf.mxu0
  %v1504 = vpop.f32.mrf.mxu0
  %v1505 = vadd.f32 0.0, %v1504
  %v1506 = vpop.f32.mrf.mxu0
  %1507 = vmatprep.mubr.bf16.mxu0 0
  %1508 = vmatmul.mubr.bf16.gmra.mxu0 %v1465
  %v1509 = vpop.f32.mrf.mxu0
  %v1510 = vadd.f32 0.0, %v1509
  %v1511 = vpop.f32.mrf.mxu0
  %v1512 = vpop.f32.mrf.mxu0
  %v1513 = vadd.f32 0.0, %v1512
  %v1514 = vpop.f32.mrf.mxu0
  %1515 = vdwg.mxu0
  %v1516 = vrcp.pop %v1449
  %v1517 = vrcp.pop %v1452
  %v1518 = vrcp.pop %v1455
  %v1519 = vrcp.pop %v1458
  %v1520 = vmul.f32 %v1502, %v1516
  %v1521 = vmul.f32 %v1505, %v1517
  %v1522 = vmul.f32 %v1510, %v1518
  %v1523 = vmul.f32 %v1513, %v1519
  %1524 = vset.pattern.permute.xlu0 1
  %1525 = vperm.xlu0 %1524, %v1325
  %v1526 = vpop.permute.xlu0 %1525
  %1528 = vset.pattern.permute.xlu0 1
  %1529 = vperm.xlu0 %1528, %v1328
  %v1530 = vpop.permute.xlu0 %1529
  %1532 = vset.pattern.permute.xlu0 1
  %1533 = vperm.xlu0 %1532, %v1333
  %v1534 = vpop.permute.xlu0 %1533
  %1536 = vset.pattern.permute.xlu0 1
  %1537 = vperm.xlu0 %1536, %v1336
  %v1538 = vpop.permute.xlu0 %1537
  %v1540 = vlaneseq
  %v1541 = vshrl.u32 %v1540, 7
  %v1542 = vsub.s32 1, %v1541
  %v1543 = vrot.slane %v1374, %v1542
  %v1544 = vadd.f32 %v1526, %v1543
  %v1545 = vadd.f32 %v1530, %v1543
  %v1546 = vadd.f32 %v1534, %v1543
  %v1547 = vadd.f32 %v1538, %v1543
  %vm1548 = vcmp.gt.f32.partialorder %v1544, 0.0
  %vm1549 = vcmp.gt.f32.partialorder %v1545, 0.0
  %vm1550 = vcmp.gt.f32.partialorder %v1546, 0.0
  %vm1551 = vcmp.gt.f32.partialorder %v1547, 0.0
  %v1552 = vmul.f32 %v1544, 0.2
  %v1553 = vmul.f32 %v1545, 0.2
  %v1554 = vmul.f32 %v1546, 0.2
  %v1555 = vmul.f32 %v1547, 0.2
  %v1556 = vsel %vm1548, %v1544, %v1552
  %v1557 = vsel %vm1549, %v1545, %v1553
  %v1558 = vsel %vm1550, %v1546, %v1554
  %v1559 = vsel %vm1551, %v1547, %v1555
  %v1560 = vadd.f32 %v1556, %v42
  %v1561 = vadd.f32 %v1557, %v43
  %v1562 = vadd.f32 %v1558, %v44
  %v1563 = vadd.f32 %v1559, %v45
  %v1564 = vsel %vm445, %v1560, -inf
  %1565 = vmax.xlane.f32.xlu0 %v1564
  %v1566 = vpop.xlane.xlu0 %1565
  %v1567 = vsel %vm445, %v1561, -inf
  %1568 = vmax.xlane.f32.xlu0 %v1567
  %v1569 = vpop.xlane.xlu0 %1568
  %v1570 = vsel %vm445, %v1562, -inf
  %1571 = vmax.xlane.f32.xlu0 %v1570
  %v1572 = vpop.xlane.xlu0 %1571
  %v1573 = vsel %vm445, %v1563, -inf
  %1574 = vmax.xlane.f32.xlu0 %v1573
  %v1575 = vpop.xlane.xlu0 %1574
  %v1576 = vsub.f32 %v1560, %v1566
  %v1577 = vsub.f32 %v1561, %v1569
  %v1578 = vsub.f32 %v1562, %v1572
  %v1579 = vsub.f32 %v1563, %v1575
  %v1580 = vmul.f32 %v1576, 1.442695
  %v1581 = vpow.pop %v1580
  %v1582 = vmul.f32 %v1577, 1.442695
  %v1583 = vpow.pop %v1582
  %v1584 = vmul.f32 %v1578, 1.442695
  %v1585 = vpow.pop %v1584
  %v1586 = vmul.f32 %v1579, 1.442695
  %v1587 = vpow.pop %v1586
  %v1588 = vsel %vm445, %v1581, 0.0
  %1589 = vadd.xlane.f32.xlu0 %v1588
  %v1590 = vpop.xlane.xlu0 %1589
  %v1591 = vsel %vm445, %v1583, 0.0
  %1592 = vadd.xlane.f32.xlu0 %v1591
  %v1593 = vpop.xlane.xlu0 %1592
  %v1594 = vsel %vm445, %v1585, 0.0
  %1595 = vadd.xlane.f32.xlu0 %v1594
  %v1596 = vpop.xlane.xlu0 %1595
  %v1597 = vsel %vm445, %v1587, 0.0
  %1598 = vadd.xlane.f32.xlu0 %v1597
  %v1599 = vpop.xlane.xlu0 %1598
  %v1600 = vpack.c.bf16 %v1583, %v1581
  %v1601 = vpack.c.bf16 %v1587, %v1585
  %1604 = vrot.lane.b32.xlu0 %v1233, 112
  %v1605 = vpop.permute.xlu0 %1604
  %1606 = vrot.lane.b32.xlu0 %v1234, 112
  %v1607 = vpop.permute.xlu0 %1606
  %v1611 = vsel %vm445, %v1600, 0
  %v1614 = vsel %vm445, %v1601, 0
  %1616 = vmatprep.subr.bf16.mxu0 0
  %1617 = vmatpush1.bf16.msra.mxu0 0
  %1618 = vmatprep.subr.bf16.mxu0 0
  %1619 = vmatpush1.bf16.msra.mxu0 0
  %1620 = vmatprep.subr.bf16.mxu0 0
  %1621 = vmatpush1.bf16.msra.mxu0 0
  %1622 = vmatprep.subr.bf16.mxu0 0
  %1623 = vmatpush1.bf16.msra.mxu0 0
  %1624 = vmatprep.subr.bf16.mxu0 0
  %1625 = vmatpush1.bf16.msra.mxu0 0
  %1626 = vmatprep.subr.bf16.mxu0 0
  %1627 = vmatpush1.bf16.msra.mxu0 0
  %1628 = vmatprep.subr.bf16.mxu0 0
  %1629 = vmatpush1.bf16.msra.mxu0 %v1607
  %1630 = vmatprep.subr.bf16.mxu0 0
  %1631 = vmatpush1.bf16.msra.mxu0 %v1605
  %1632 = vmatprep.subr.bf16.mxu0 0
  %1633 = vmatpush2.bf16.msra.mxu0 0
  %1634 = vmatprep.subr.bf16.mxu0 0
  %1635 = vmatpush2.bf16.msra.mxu0 0
  %1636 = vmatprep.subr.bf16.mxu0 0
  %1637 = vmatpush2.bf16.msra.mxu0 0
  %1638 = vmatprep.subr.bf16.mxu0 0
  %1639 = vmatpush2.bf16.msra.mxu0 0
  %1640 = vmatprep.subr.bf16.mxu0 0
  %1641 = vmatpush2.bf16.msra.mxu0 0
  %1642 = vmatprep.subr.bf16.mxu0 0
  %1643 = vmatpush2.bf16.msra.mxu0 0
  %1644 = vmatprep.subr.bf16.mxu0 0
  %1645 = vmatpush2.bf16.msra.mxu0 0
  %1646 = vmatprep.subr.bf16.mxu0 0
  %1647 = vmatpush2.bf16.msra.mxu0 0
  %1648 = vmatprep.mubr.bf16.mxu0 0
  %1649 = vmatmul.mubr.bf16.gmra.mxu0 %v1611
  %v1650 = vpop.f32.mrf.mxu0
  %v1651 = vadd.f32 0.0, %v1650
  %v1652 = vpop.f32.mrf.mxu0
  %v1653 = vpop.f32.mrf.mxu0
  %v1654 = vadd.f32 0.0, %v1653
  %v1655 = vpop.f32.mrf.mxu0
  %1656 = vmatprep.mubr.bf16.mxu0 0
  %1657 = vmatmul.mubr.bf16.gmra.mxu0 %v1614
  %v1658 = vpop.f32.mrf.mxu0
  %v1659 = vadd.f32 0.0, %v1658
  %v1660 = vpop.f32.mrf.mxu0
  %v1661 = vpop.f32.mrf.mxu0
  %v1662 = vadd.f32 0.0, %v1661
  %v1663 = vpop.f32.mrf.mxu0
  %1664 = vdwg.mxu0
  %v1665 = vrcp.pop %v1590
  %v1666 = vrcp.pop %v1593
  %v1667 = vrcp.pop %v1596
  %v1668 = vrcp.pop %v1599
  %v1669 = vmul.f32 %v1651, %v1665
  %v1670 = vmul.f32 %v1654, %v1666
  %v1671 = vmul.f32 %v1659, %v1667
  %v1672 = vmul.f32 %v1662, %v1668
  %1673 = vset.pattern.permute.xlu0 2
  %1674 = vperm.xlu0 %1673, %v1325
  %v1675 = vpop.permute.xlu0 %1674
  %1677 = vset.pattern.permute.xlu0 2
  %1678 = vperm.xlu0 %1677, %v1328
  %v1679 = vpop.permute.xlu0 %1678
  %1681 = vset.pattern.permute.xlu0 2
  %1682 = vperm.xlu0 %1681, %v1333
  %v1683 = vpop.permute.xlu0 %1682
  %1685 = vset.pattern.permute.xlu0 2
  %1686 = vperm.xlu0 %1685, %v1336
  %v1687 = vpop.permute.xlu0 %1686
  %v1689 = vlaneseq
  %v1690 = vshrl.u32 %v1689, 7
  %v1691 = vsub.s32 2, %v1690
  %v1692 = vrot.slane %v1374, %v1691
  %v1693 = vadd.f32 %v1675, %v1692
  %v1694 = vadd.f32 %v1679, %v1692
  %v1695 = vadd.f32 %v1683, %v1692
  %v1696 = vadd.f32 %v1687, %v1692
  %vm1697 = vcmp.gt.f32.partialorder %v1693, 0.0
  %vm1698 = vcmp.gt.f32.partialorder %v1694, 0.0
  %vm1699 = vcmp.gt.f32.partialorder %v1695, 0.0
  %vm1700 = vcmp.gt.f32.partialorder %v1696, 0.0
  %v1701 = vmul.f32 %v1693, 0.2
  %v1702 = vmul.f32 %v1694, 0.2
  %v1703 = vmul.f32 %v1695, 0.2
  %v1704 = vmul.f32 %v1696, 0.2
  %v1705 = vsel %vm1697, %v1693, %v1701
  %v1706 = vsel %vm1698, %v1694, %v1702
  %v1707 = vsel %vm1699, %v1695, %v1703
  %v1708 = vsel %vm1700, %v1696, %v1704
  %v1709 = vadd.f32 %v1705, %v42
  %v1710 = vadd.f32 %v1706, %v43
  %v1711 = vadd.f32 %v1707, %v44
  %v1712 = vadd.f32 %v1708, %v45
  %v1713 = vsel %vm445, %v1709, -inf
  %1714 = vmax.xlane.f32.xlu0 %v1713
  %v1715 = vpop.xlane.xlu0 %1714
  %v1716 = vsel %vm445, %v1710, -inf
  %1717 = vmax.xlane.f32.xlu0 %v1716
  %v1718 = vpop.xlane.xlu0 %1717
  %v1719 = vsel %vm445, %v1711, -inf
  %1720 = vmax.xlane.f32.xlu0 %v1719
  %v1721 = vpop.xlane.xlu0 %1720
  %v1722 = vsel %vm445, %v1712, -inf
  %1723 = vmax.xlane.f32.xlu0 %v1722
  %v1724 = vpop.xlane.xlu0 %1723
  %v1725 = vsub.f32 %v1709, %v1715
  %v1726 = vsub.f32 %v1710, %v1718
  %v1727 = vsub.f32 %v1711, %v1721
  %v1728 = vsub.f32 %v1712, %v1724
  %v1729 = vmul.f32 %v1725, 1.442695
  %v1730 = vpow.pop %v1729
  %v1731 = vmul.f32 %v1726, 1.442695
  %v1732 = vpow.pop %v1731
  %v1733 = vmul.f32 %v1727, 1.442695
  %v1734 = vpow.pop %v1733
  %v1735 = vmul.f32 %v1728, 1.442695
  %v1736 = vpow.pop %v1735
  %v1737 = vsel %vm445, %v1730, 0.0
  %1738 = vadd.xlane.f32.xlu0 %v1737
  %v1739 = vpop.xlane.xlu0 %1738
  %v1740 = vsel %vm445, %v1732, 0.0
  %1741 = vadd.xlane.f32.xlu0 %v1740
  %v1742 = vpop.xlane.xlu0 %1741
  %v1743 = vsel %vm445, %v1734, 0.0
  %1744 = vadd.xlane.f32.xlu0 %v1743
  %v1745 = vpop.xlane.xlu0 %1744
  %v1746 = vsel %vm445, %v1736, 0.0
  %1747 = vadd.xlane.f32.xlu0 %v1746
  %v1748 = vpop.xlane.xlu0 %1747
  %v1749 = vpack.c.bf16 %v1732, %v1730
  %v1750 = vpack.c.bf16 %v1736, %v1734
  %1751 = vrot.lane.b32.xlu0 %v1233, 96
  %v1752 = vpop.permute.xlu0 %1751
  %1753 = vrot.lane.b32.xlu0 %v1234, 96
  %v1754 = vpop.permute.xlu0 %1753
  %v1758 = vsel %vm445, %v1749, 0
  %v1761 = vsel %vm445, %v1750, 0
  %1763 = vmatprep.subr.bf16.mxu0 0
  %1764 = vmatpush1.bf16.msra.mxu0 0
  %1765 = vmatprep.subr.bf16.mxu0 0
  %1766 = vmatpush1.bf16.msra.mxu0 0
  %1767 = vmatprep.subr.bf16.mxu0 0
  %1768 = vmatpush1.bf16.msra.mxu0 0
  %1769 = vmatprep.subr.bf16.mxu0 0
  %1770 = vmatpush1.bf16.msra.mxu0 0
  %1771 = vmatprep.subr.bf16.mxu0 0
  %1772 = vmatpush1.bf16.msra.mxu0 0
  %1773 = vmatprep.subr.bf16.mxu0 0
  %1774 = vmatpush1.bf16.msra.mxu0 0
  %1775 = vmatprep.subr.bf16.mxu0 0
  %1776 = vmatpush1.bf16.msra.mxu0 %v1754
  %1777 = vmatprep.subr.bf16.mxu0 0
  %1778 = vmatpush1.bf16.msra.mxu0 %v1752
  %1779 = vmatprep.subr.bf16.mxu0 0
  %1780 = vmatpush2.bf16.msra.mxu0 0
  %1781 = vmatprep.subr.bf16.mxu0 0
  %1782 = vmatpush2.bf16.msra.mxu0 0
  %1783 = vmatprep.subr.bf16.mxu0 0
  %1784 = vmatpush2.bf16.msra.mxu0 0
  %1785 = vmatprep.subr.bf16.mxu0 0
  %1786 = vmatpush2.bf16.msra.mxu0 0
  %1787 = vmatprep.subr.bf16.mxu0 0
  %1788 = vmatpush2.bf16.msra.mxu0 0
  %1789 = vmatprep.subr.bf16.mxu0 0
  %1790 = vmatpush2.bf16.msra.mxu0 0
  %1791 = vmatprep.subr.bf16.mxu0 0
  %1792 = vmatpush2.bf16.msra.mxu0 0
  %1793 = vmatprep.subr.bf16.mxu0 0
  %1794 = vmatpush2.bf16.msra.mxu0 0
  %1795 = vmatprep.mubr.bf16.mxu0 0
  %1796 = vmatmul.mubr.bf16.gmra.mxu0 %v1758
  %v1797 = vpop.f32.mrf.mxu0
  %v1798 = vadd.f32 0.0, %v1797
  %v1799 = vpop.f32.mrf.mxu0
  %v1800 = vpop.f32.mrf.mxu0
  %v1801 = vadd.f32 0.0, %v1800
  %v1802 = vpop.f32.mrf.mxu0
  %1803 = vmatprep.mubr.bf16.mxu0 0
  %1804 = vmatmul.mubr.bf16.gmra.mxu0 %v1761
  %v1805 = vpop.f32.mrf.mxu0
  %v1806 = vadd.f32 0.0, %v1805
  %v1807 = vpop.f32.mrf.mxu0
  %v1808 = vpop.f32.mrf.mxu0
  %v1809 = vadd.f32 0.0, %v1808
  %v1810 = vpop.f32.mrf.mxu0
  %1811 = vdwg.mxu0
  %v1812 = vrcp.pop %v1739
  %v1813 = vrcp.pop %v1742
  %v1814 = vrcp.pop %v1745
  %v1815 = vrcp.pop %v1748
  %v1816 = vmul.f32 %v1798, %v1812
  %v1817 = vmul.f32 %v1801, %v1813
  %v1818 = vmul.f32 %v1806, %v1814
  %v1819 = vmul.f32 %v1809, %v1815
  %1820 = vset.pattern.permute.xlu0 3
  %1821 = vperm.xlu0 %1820, %v1325
  %v1822 = vpop.permute.xlu0 %1821
  %1824 = vset.pattern.permute.xlu0 3
  %1825 = vperm.xlu0 %1824, %v1328
  %v1826 = vpop.permute.xlu0 %1825
  %1828 = vset.pattern.permute.xlu0 3
  %1829 = vperm.xlu0 %1828, %v1333
  %v1830 = vpop.permute.xlu0 %1829
  %1832 = vset.pattern.permute.xlu0 3
  %1833 = vperm.xlu0 %1832, %v1336
  %v1834 = vpop.permute.xlu0 %1833
  %v1836 = vlaneseq
  %v1837 = vshrl.u32 %v1836, 7
  %v1838 = vsub.s32 3, %v1837
  %v1839 = vrot.slane %v1374, %v1838
  %v1840 = vadd.f32 %v1822, %v1839
  %v1841 = vadd.f32 %v1826, %v1839
  %v1842 = vadd.f32 %v1830, %v1839
  %v1843 = vadd.f32 %v1834, %v1839
  %vm1844 = vcmp.gt.f32.partialorder %v1840, 0.0
  %vm1845 = vcmp.gt.f32.partialorder %v1841, 0.0
  %vm1846 = vcmp.gt.f32.partialorder %v1842, 0.0
  %vm1847 = vcmp.gt.f32.partialorder %v1843, 0.0
  %v1848 = vmul.f32 %v1840, 0.2
  %v1849 = vmul.f32 %v1841, 0.2
  %v1850 = vmul.f32 %v1842, 0.2
  %v1851 = vmul.f32 %v1843, 0.2
  %v1852 = vsel %vm1844, %v1840, %v1848
  %v1853 = vsel %vm1845, %v1841, %v1849
  %v1854 = vsel %vm1846, %v1842, %v1850
  %v1855 = vsel %vm1847, %v1843, %v1851
  %v1856 = vadd.f32 %v1852, %v42
  %v1857 = vadd.f32 %v1853, %v43
  %v1858 = vadd.f32 %v1854, %v44
  %v1859 = vadd.f32 %v1855, %v45
  %v1860 = vsel %vm445, %v1856, -inf
  %1861 = vmax.xlane.f32.xlu0 %v1860
  %v1862 = vpop.xlane.xlu0 %1861
  %v1863 = vsel %vm445, %v1857, -inf
  %1864 = vmax.xlane.f32.xlu0 %v1863
  %v1865 = vpop.xlane.xlu0 %1864
  %v1866 = vsel %vm445, %v1858, -inf
  %1867 = vmax.xlane.f32.xlu0 %v1866
  %v1868 = vpop.xlane.xlu0 %1867
  %v1869 = vsel %vm445, %v1859, -inf
  %1870 = vmax.xlane.f32.xlu0 %v1869
  %v1871 = vpop.xlane.xlu0 %1870
  %v1872 = vsub.f32 %v1856, %v1862
  %v1873 = vsub.f32 %v1857, %v1865
  %v1874 = vsub.f32 %v1858, %v1868
  %v1875 = vsub.f32 %v1859, %v1871
  %v1876 = vmul.f32 %v1872, 1.442695
  %v1877 = vpow.pop %v1876
  %v1878 = vmul.f32 %v1873, 1.442695
  %v1879 = vpow.pop %v1878
  %v1880 = vmul.f32 %v1874, 1.442695
  %v1881 = vpow.pop %v1880
  %v1882 = vmul.f32 %v1875, 1.442695
  %v1883 = vpow.pop %v1882
  %v1884 = vsel %vm445, %v1877, 0.0
  %1885 = vadd.xlane.f32.xlu0 %v1884
  %v1886 = vpop.xlane.xlu0 %1885
  %v1887 = vsel %vm445, %v1879, 0.0
  %1888 = vadd.xlane.f32.xlu0 %v1887
  %v1889 = vpop.xlane.xlu0 %1888
  %v1890 = vsel %vm445, %v1881, 0.0
  %1891 = vadd.xlane.f32.xlu0 %v1890
  %v1892 = vpop.xlane.xlu0 %1891
  %v1893 = vsel %vm445, %v1883, 0.0
  %1894 = vadd.xlane.f32.xlu0 %v1893
  %v1895 = vpop.xlane.xlu0 %1894
  %v1896 = vpack.c.bf16 %v1879, %v1877
  %v1897 = vpack.c.bf16 %v1883, %v1881
  %1898 = vrot.lane.b32.xlu0 %v1233, 80
  %v1899 = vpop.permute.xlu0 %1898
  %1900 = vrot.lane.b32.xlu0 %v1234, 80
  %v1901 = vpop.permute.xlu0 %1900
  %v1905 = vsel %vm445, %v1896, 0
  %v1908 = vsel %vm445, %v1897, 0
  %1910 = vmatprep.subr.bf16.mxu0 0
  %1911 = vmatpush1.bf16.msra.mxu0 0
  %1912 = vmatprep.subr.bf16.mxu0 0
  %1913 = vmatpush1.bf16.msra.mxu0 0
  %1914 = vmatprep.subr.bf16.mxu0 0
  %1915 = vmatpush1.bf16.msra.mxu0 0
  %1916 = vmatprep.subr.bf16.mxu0 0
  %1917 = vmatpush1.bf16.msra.mxu0 0
  %1918 = vmatprep.subr.bf16.mxu0 0
  %1919 = vmatpush1.bf16.msra.mxu0 0
  %1920 = vmatprep.subr.bf16.mxu0 0
  %1921 = vmatpush1.bf16.msra.mxu0 0
  %1922 = vmatprep.subr.bf16.mxu0 0
  %1923 = vmatpush1.bf16.msra.mxu0 %v1901
  %1924 = vmatprep.subr.bf16.mxu0 0
  %1925 = vmatpush1.bf16.msra.mxu0 %v1899
  %1926 = vmatprep.subr.bf16.mxu0 0
  %1927 = vmatpush2.bf16.msra.mxu0 0
  %1928 = vmatprep.subr.bf16.mxu0 0
  %1929 = vmatpush2.bf16.msra.mxu0 0
  %1930 = vmatprep.subr.bf16.mxu0 0
  %1931 = vmatpush2.bf16.msra.mxu0 0
  %1932 = vmatprep.subr.bf16.mxu0 0
  %1933 = vmatpush2.bf16.msra.mxu0 0
  %1934 = vmatprep.subr.bf16.mxu0 0
  %1935 = vmatpush2.bf16.msra.mxu0 0
  %1936 = vmatprep.subr.bf16.mxu0 0
  %1937 = vmatpush2.bf16.msra.mxu0 0
  %1938 = vmatprep.subr.bf16.mxu0 0
  %1939 = vmatpush2.bf16.msra.mxu0 0
  %1940 = vmatprep.subr.bf16.mxu0 0
  %1941 = vmatpush2.bf16.msra.mxu0 0
  %1942 = vmatprep.mubr.bf16.mxu0 0
  %1943 = vmatmul.mubr.bf16.gmra.mxu0 %v1905
  %v1944 = vpop.f32.mrf.mxu0
  %v1945 = vadd.f32 0.0, %v1944
  %v1946 = vpop.f32.mrf.mxu0
  %v1947 = vpop.f32.mrf.mxu0
  %v1948 = vadd.f32 0.0, %v1947
  %v1949 = vpop.f32.mrf.mxu0
  %1950 = vmatprep.mubr.bf16.mxu0 0
  %1951 = vmatmul.mubr.bf16.gmra.mxu0 %v1908
  %v1952 = vpop.f32.mrf.mxu0
  %v1953 = vadd.f32 0.0, %v1952
  %v1954 = vpop.f32.mrf.mxu0
  %v1955 = vpop.f32.mrf.mxu0
  %v1956 = vadd.f32 0.0, %v1955
  %v1957 = vpop.f32.mrf.mxu0
  %1958 = vdwg.mxu0
  %v1959 = vrcp.pop %v1886
  %v1960 = vrcp.pop %v1889
  %v1961 = vrcp.pop %v1892
  %v1962 = vrcp.pop %v1895
  %v1963 = vmul.f32 %v1945, %v1959
  %v1964 = vmul.f32 %v1948, %v1960
  %v1965 = vmul.f32 %v1953, %v1961
  %v1966 = vmul.f32 %v1956, %v1962
  %1971 = vrot.lane.b32.xlu0 %v1669, 16
  %v1972 = vpop.permute.xlu0 %1971
  %1973 = vrot.lane.b32.xlu0 %v1670, 16
  %v1974 = vpop.permute.xlu0 %1973
  %1975 = vrot.lane.b32.xlu0 %v1671, 16
  %v1976 = vpop.permute.xlu0 %1975
  %1977 = vrot.lane.b32.xlu0 %v1672, 16
  %v1978 = vpop.permute.xlu0 %1977
  %1987 = vrot.lane.b32.xlu0 %v1816, 32
  %v1988 = vpop.permute.xlu0 %1987
  %1989 = vrot.lane.b32.xlu0 %v1817, 32
  %v1990 = vpop.permute.xlu0 %1989
  %1991 = vrot.lane.b32.xlu0 %v1818, 32
  %v1992 = vpop.permute.xlu0 %1991
  %1993 = vrot.lane.b32.xlu0 %v1819, 32
  %v1994 = vpop.permute.xlu0 %1993
  %2003 = vrot.lane.b32.xlu0 %v1963, 48
  %v2004 = vpop.permute.xlu0 %2003
  %2005 = vrot.lane.b32.xlu0 %v1964, 48
  %v2006 = vpop.permute.xlu0 %2005
  %2007 = vrot.lane.b32.xlu0 %v1965, 48
  %v2008 = vpop.permute.xlu0 %2007
  %2009 = vrot.lane.b32.xlu0 %v1966, 48
  %v2010 = vpop.permute.xlu0 %2009
  %v2015 = vsel %vm98, %v1520, %v1972
  %v2016 = vsel %vm98, %v1521, %v1974
  %v2017 = vsel %vm98, %v1522, %v1976
  %v2018 = vsel %vm98, %v1523, %v1978
  %v2019 = vsel %vm445, %v2015, %v1988
  %v2020 = vsel %vm445, %v2016, %v1990
  %v2021 = vsel %vm445, %v2017, %v1992
  %v2022 = vsel %vm445, %v2018, %v1994
  %v2023 = vsel %vm1046, %v2019, %v2004
  %v2024 = vsel %vm1046, %v2020, %v2006
  %v2025 = vsel %vm1046, %v2021, %v2008
  %v2026 = vsel %vm1046, %v2022, %v2010
  %v2027 = vadd.f32 %v2023, %v1270
  %v2028 = vadd.f32 %v2024, %v1273
  %v2029 = vadd.f32 %v2025, %v1278
  %v2030 = vadd.f32 %v2026, %v1281
  %v2031 = vadd.f32 %v2027, %v78
  %v2032 = vadd.f32 %v2028, %v78
  %v2033 = vadd.f32 %v2029, %v78
  %v2034 = vadd.f32 %v2030, %v78
  %vm2035 = vcmp.gt.f32.partialorder %v2031, 0.0
  %vm2036 = vcmp.gt.f32.partialorder %v2032, 0.0
  %vm2037 = vcmp.gt.f32.partialorder %v2033, 0.0
  %vm2038 = vcmp.gt.f32.partialorder %v2034, 0.0
  %v2039 = vmul.f32 %v2031, 1.442695
  %v2040 = vpow.pop %v2039
  %v2041 = vmul.f32 %v2032, 1.442695
  %v2042 = vpow.pop %v2041
  %v2043 = vmul.f32 %v2033, 1.442695
  %v2044 = vpow.pop %v2043
  %v2045 = vmul.f32 %v2034, 1.442695
  %v2046 = vpow.pop %v2045
  %v2047 = vsub.f32 %v2040, 1.0
  %v2048 = vsub.f32 %v2042, 1.0
  %v2049 = vsub.f32 %v2044, 1.0
  %v2050 = vsub.f32 %v2046, 1.0
  %v2051 = vsel %vm2035, %v2031, %v2047
  %v2052 = vsel %vm2036, %v2032, %v2048
  %v2053 = vsel %vm2037, %v2033, %v2049
  %v2054 = vsel %vm2038, %v2034, %v2050
  %v2055 = vpack.c.bf16 %v2052, %v2051
  %v2056 = vpack.c.bf16 %v2054, %v2053
  %v2058 = vsel %vm302, %v2055, 0
  %v2061 = vsel %vm302, %v2056, 0
  %2063 = vmatprep.subr.bf16.mxu0 0
  %2064 = vmatpush1.bf16.msra.mxu0 0
  %2065 = vmatprep.subr.bf16.mxu0 0
  %2066 = vmatpush1.bf16.msra.mxu0 0
  %2067 = vmatprep.subr.bf16.mxu0 0
  %2068 = vmatpush1.bf16.msra.mxu0 0
  %2069 = vmatprep.subr.bf16.mxu0 0
  %2070 = vmatpush1.bf16.msra.mxu0 0
  %2071 = vmatprep.subr.bf16.mxu0 0
  %2072 = vmatpush1.bf16.msra.mxu0 %v1100
  %2073 = vmatprep.subr.bf16.mxu0 0
  %2074 = vmatpush1.bf16.msra.mxu0 %v1099
  %2075 = vmatprep.subr.bf16.mxu0 0
  %2076 = vmatpush1.bf16.msra.mxu0 %v1098
  %2077 = vmatprep.subr.bf16.mxu0 0
  %2078 = vmatpush1.bf16.msra.mxu0 %v1097
  %2079 = vmatprep.subr.bf16.mxu0 0
  %2080 = vmatpush2.bf16.msra.mxu0 0
  %2081 = vmatprep.subr.bf16.mxu0 0
  %2082 = vmatpush2.bf16.msra.mxu0 0
  %2083 = vmatprep.subr.bf16.mxu0 0
  %2084 = vmatpush2.bf16.msra.mxu0 0
  %2085 = vmatprep.subr.bf16.mxu0 0
  %2086 = vmatpush2.bf16.msra.mxu0 0
  %2087 = vmatprep.subr.bf16.mxu0 0
  %2088 = vmatpush2.bf16.msra.mxu0 0
  %2089 = vmatprep.subr.bf16.mxu0 0
  %2090 = vmatpush2.bf16.msra.mxu0 0
  %2091 = vmatprep.subr.bf16.mxu0 0
  %2092 = vmatpush2.bf16.msra.mxu0 0
  %2093 = vmatprep.subr.bf16.mxu0 0
  %2094 = vmatpush2.bf16.msra.mxu0 0
  %2095 = vmatprep.mubr.bf16.mxu0 0
  %2096 = vmatmul.mubr.bf16.gmra.mxu0 %v2058
  %v2097 = vpop.f32.mrf.mxu0
  %v2098 = vadd.f32 0.0, %v2097
  %v2099 = vpop.f32.mrf.mxu0
  %v2100 = vpop.f32.mrf.mxu0
  %v2101 = vadd.f32 0.0, %v2100
  %v2102 = vpop.f32.mrf.mxu0
  %2103 = vmatprep.mubr.bf16.mxu0 0
  %2104 = vmatmul.mubr.bf16.gmra.mxu0 %v2061
  %v2105 = vpop.f32.mrf.mxu0
  %v2106 = vadd.f32 0.0, %v2105
  %v2107 = vpop.f32.mrf.mxu0
  %v2108 = vpop.f32.mrf.mxu0
  %v2109 = vadd.f32 0.0, %v2108
  %v2110 = vpop.f32.mrf.mxu0
  %2111 = vdwg.mxu0
  %v2112 = vsub.f32 %v2098, %v1168
  %v2113 = vsub.f32 %v2101, %v1169
  %v2114 = vsub.f32 %v2106, %v1170
  %v2115 = vsub.f32 %v2109, %v1171
  %v2116 = vsub.f32 %v2112, %v1172
  %v2117 = vsub.f32 %v2113, %v1173
  %v2118 = vsub.f32 %v2114, %v1174
  %v2119 = vsub.f32 %v2115, %v1175
  %v2120 = vadd.f32 %v1168, %v2116
  %v2121 = vadd.f32 %v1169, %v2117
  %v2122 = vadd.f32 %v1170, %v2118
  %v2123 = vadd.f32 %v1171, %v2119
  %v2124 = vadd.f32 %v1172, %v2120
  %v2125 = vadd.f32 %v1173, %v2121
  %v2126 = vadd.f32 %v1174, %v2122
  %v2127 = vadd.f32 %v1175, %v2123
  %v2128 = vpack.c.bf16 %v2125, %v2124
  %v2129 = vpack.c.bf16 %v2127, %v2126
  %v2131 = vlaneseq
  %v2132 = vshrl.u32 %v2131, 7
  %v2133 = vsub.s32 0, %v2132
  %v2134 = vrot.slane %v72, %v2133
  %v2138 = vunpack.c.l.b16 %v69
  %v2139 = vunpack.c.l.b16 %v70
  %v2140 = vpack.c.b16 %v2139, %v2138
  %v2143 = vsel %vm98, %v2128, 0
  %v2146 = vsel %vm98, %v2129, 0
  %2148 = vmatprep.subr.bf16.mxu0 0
  %2149 = vmatpush1.bf16.msra.mxu0 0
  %2150 = vmatprep.subr.bf16.mxu0 0
  %2151 = vmatpush1.bf16.msra.mxu0 0
  %2152 = vmatprep.subr.bf16.mxu0 0
  %2153 = vmatpush1.bf16.msra.mxu0 0
  %2154 = vmatprep.subr.bf16.mxu0 0
  %2155 = vmatpush1.bf16.msra.mxu0 0
  %2156 = vmatprep.subr.bf16.mxu0 0
  %2157 = vmatpush1.bf16.msra.mxu0 0
  %2158 = vmatprep.subr.bf16.mxu0 0
  %2159 = vmatpush1.bf16.msra.mxu0 0
  %2160 = vmatprep.subr.bf16.mxu0 0
  %2161 = vmatpush1.bf16.msra.mxu0 0
  %2162 = vmatprep.subr.bf16.mxu0 0
  %2163 = vmatpush1.bf16.msra.mxu0 %v2140
  %2164 = vmatprep.subr.bf16.mxu0 0
  %2165 = vmatpush2.bf16.msra.mxu0 0
  %2166 = vmatprep.subr.bf16.mxu0 0
  %2167 = vmatpush2.bf16.msra.mxu0 0
  %2168 = vmatprep.subr.bf16.mxu0 0
  %2169 = vmatpush2.bf16.msra.mxu0 0
  %2170 = vmatprep.subr.bf16.mxu0 0
  %2171 = vmatpush2.bf16.msra.mxu0 0
  %2172 = vmatprep.subr.bf16.mxu0 0
  %2173 = vmatpush2.bf16.msra.mxu0 0
  %2174 = vmatprep.subr.bf16.mxu0 0
  %2175 = vmatpush2.bf16.msra.mxu0 0
  %2176 = vmatprep.subr.bf16.mxu0 0
  %2177 = vmatpush2.bf16.msra.mxu0 0
  %2178 = vmatprep.subr.bf16.mxu0 0
  %2179 = vmatpush2.bf16.msra.mxu0 0
  %2180 = vmatprep.mubr.bf16.mxu0 0
  %2181 = vmatmul.mubr.bf16.gmra.mxu0 %v2143
  %v2182 = vpop.f32.mrf.mxu0
  %v2183 = vadd.f32 %v2134, %v2182
  %v2184 = vpop.f32.mrf.mxu0
  %v2185 = vpop.f32.mrf.mxu0
  %v2186 = vadd.f32 %v2134, %v2185
  %v2187 = vpop.f32.mrf.mxu0
  %2188 = vmatprep.mubr.bf16.mxu0 0
  %2189 = vmatmul.mubr.bf16.gmra.mxu0 %v2146
  %v2190 = vpop.f32.mrf.mxu0
  %v2191 = vadd.f32 %v2134, %v2190
  %v2192 = vpop.f32.mrf.mxu0
  %v2193 = vpop.f32.mrf.mxu0
  %v2194 = vadd.f32 %v2134, %v2193
  %v2195 = vpop.f32.mrf.mxu0
  %2196 = vdwg.mxu0
  %2197 = vst [vmem:[%s12] sm:$0xff] %v2183
  %2198 = vst [vmem:[%s12 + $0x8] sm:$0xff] %v2186
  %2199 = vst [vmem:[%s12 + $0x10] sm:$0xff] %v2191
  %2200 = vst [vmem:[%s12 + $0x18] sm:$0xff] %v2194
  // Predicated region
  $region50: #{_lambda_.1} parent=0 // pred_check
    _
  $region51: #{_lambda_.1} parent=0 // pred_check_branch
    %2202 = sbr.rel (0) target = $region53
  $region52: #{_lambda_.1} parent=0 // pred_region
    _
  $region53: #{_lambda_.1} parent=0 // pred_fallthru
    _
  // Predicated region
  $region54: #{_lambda_.1} parent=0 // pred_check
    _
  $region55: #{_lambda_.1} parent=0 // pred_check_branch
    %2204 = sbr.rel (0) target = $region57
  $region56: #{_lambda_.1} parent=0 // pred_region
    _
  $region57: #{_lambda_.1} parent=0 // pred_fallthru
    _

</llo_original>
